<compile_context>
chip_gen: v6e
topology: v6e:2x2x1
jax: 0.10.0
libtpu: 0.0.40
codegen_flags: <defaults>
</compile_context>

<pallas_src>
import functools
import math

import jax
import jax.numpy as jnp
import numpy as np
from jax.experimental import pallas as pl
from jax.experimental.pallas import tpu as pltpu


# ---------------------------------------------------------------------------
# Fused kernel: all encoder layers for one batch item.
# grid = (B, stages); stage axis is the innermost ("arbitrary") axis and the
# token slab is carried in the `xs_ref` VMEM scratch across stages.
# ---------------------------------------------------------------------------
def _teacher_stack_kernel(
    x_ref,        # (1, S, D)            input tokens for this batch item
    mats_ref,     # (L, 2*nhead, D, D)   [0:nhead]=A_h, [nhead:2*nhead]=Bm_h
    vecs_ref,     # (L, nhead+6, D)      v_h rows, battn, ln1w, ln1b, b2, ln2w, ln2b
    w1b1_ref,     # (L, D+1, F)          rows[:D]=w1^T, row[D]=b1
    w2_ref,       # (L, F, D)            linear2.weight.T
    o_ref,        # (1, 1, S, D)         this stage's output
    xs_ref,       # VMEM scratch (S, D): tokens carried across stages
    *, nhead, d_model, eps,
):
    layer = pl.program_id(1)

    @pl.when(layer == 0)
    def _():
        xs_ref[...] = x_ref[0]

    xs = xs_ref[...]                                  # (S, D) float32

    # --- pick this layer's (tiny, VMEM-resident) weights --------------------
    mats = mats_ref[layer]                            # (2*nhead, D, D)
    vecs = vecs_ref[layer]                            # (nhead+6, D)
    w1b1 = w1b1_ref[layer]                            # (D+1, F)
    w2t = w2_ref[layer]                               # (F, D)

    vrows = vecs[0:nhead]                             # (nhead, D) folded Wk^T bq / sqrt(hd)
    battn = vecs[nhead:nhead + 1]                     # (1, D)
    ln1w = vecs[nhead + 1:nhead + 2]
    ln1b = vecs[nhead + 2:nhead + 3]
    b2 = vecs[nhead + 3:nhead + 4]
    ln2w = vecs[nhead + 4:nhead + 5]
    ln2b = vecs[nhead + 5:nhead + 6]
    w1t = w1b1[0:d_model]                             # (D, F)
    b1 = w1b1[d_model:d_model + 1]                    # (1, F)

    # Per-key additive bias rows for every head (from the folded bq term):
    # r_all[h, k] = (Wk_h^T bq_h / sqrt(hd)) . x[k, :]
    r_all = jax.lax.dot_general(
        vrows, xs, (((1,), (1,)), ((), ())),
        preferred_element_type=jnp.float32)           # (nhead, S)

    attn = jnp.zeros_like(xs)                         # (S, D)
    for h in range(nhead):                            # static, nhead == 2
        # scores_h = x A_h x^T + per-key bias row   (scale already folded)
        xa = jnp.dot(xs, mats[h], preferred_element_type=jnp.float32)
        sc = jax.lax.dot_general(
            xa, xs, (((1,), (1,)), ((), ())),
            preferred_element_type=jnp.float32)       # (S, S)
        sc = sc + r_all[h:h + 1, :]
        sc = sc - jnp.max(sc, axis=-1, keepdims=True)
        p = jnp.exp(sc)
        p = p * pl.reciprocal(jnp.sum(p, axis=-1, keepdims=True), approx=True)
        # value + out-proj folded into one (D, D) matrix per head
        xb = jnp.dot(xs, mats[nhead + h], preferred_element_type=jnp.float32)
        attn = attn + jnp.dot(p, xb, preferred_element_type=jnp.float32)
    attn = attn + battn                               # (1, D) broadcast

    # ---- residual + LayerNorm1 ---------------------------------------------
    y = xs + attn
    mu = jnp.mean(y, axis=-1, keepdims=True)
    var = jnp.mean((y - mu) * (y - mu), axis=-1, keepdims=True)
    y = (y - mu) * jax.lax.rsqrt(var + eps)
    y = y * ln1w + ln1b

    # ---- feed-forward (ReLU) ------------------------------------------------
    h1 = jnp.dot(y, w1t, preferred_element_type=jnp.float32) + b1
    h1 = jnp.maximum(h1, 0.0)
    h2 = jnp.dot(h1, w2t, preferred_element_type=jnp.float32) + b2

    # ---- residual + LayerNorm2 ----------------------------------------------
    z = y + h2
    mu2 = jnp.mean(z, axis=-1, keepdims=True)
    var2 = jnp.mean((z - mu2) * (z - mu2), axis=-1, keepdims=True)
    z = (z - mu2) * jax.lax.rsqrt(var2 + eps)
    z = z * ln2w + ln2b

    xs_ref[...] = z                                   # carry to next stage
    o_ref[0, 0] = z.astype(o_ref.dtype)


# ---------------------------------------------------------------------------
# Wrapper-side algebraic folding + packing of one layer's PyTorch weights.
# ---------------------------------------------------------------------------
def _fold_layer_params(p, *, nhead):
    D = p["out_proj_w"].shape[0]
    hd = D // nhead
    scale = 1.0 / math.sqrt(hd)
    Wq = p["in_proj_w"][0:D]
    Wk = p["in_proj_w"][D:2 * D]
    Wv = p["in_proj_w"][2 * D:3 * D]
    bq = p["in_proj_b"][0:D]
    bv = p["in_proj_b"][2 * D:3 * D]
    # (bk contributes only a per-query constant to the scores -> dropped,
    #  softmax is exactly invariant to it.)
    Wo, bo = p["out_proj_w"], p["out_proj_b"]

    A, Bm, vrows = [], [], []
    battn = bo
    for h in range(nhead):
        sl = slice(h * hd, (h + 1) * hd)
        Wq_h, Wk_h, Wv_h = Wq[sl], Wk[sl], Wv[sl]     # (hd, D)
        Wo_h = Wo[:, sl]                              # (D, hd)
        A.append((Wq_h.T @ Wk_h) * scale)             # (D, D)
        Bm.append(Wv_h.T @ Wo_h.T)                    # (D, D)
        vrows.append((Wk_h.T @ bq[sl]) * scale)       # (D,)
        battn = battn + Wo_h @ bv[sl]

    mats = jnp.stack(A + Bm, axis=0)                  # (2*nhead, D, D)
    vecs = jnp.stack(
        vrows
        + [battn, p["ln1_w"], p["ln1_b"], p["b2"], p["ln2_w"], p["ln2_b"]],
        axis=0)                                       # (nhead+6, D)
    w1b1 = jnp.concatenate([p["w1"].T, p["b1"][None, :]], axis=0)  # (D+1, F)
    w2t = p["w2"].T                                   # (F, D)
    return mats, vecs, w1b1, w2t


# ---------------------------------------------------------------------------
# build_teacher_net forward: glue in plain JAX, hot path in ONE Pallas call.
# ---------------------------------------------------------------------------
def build_teacher_net_forward(x, layer_params, *, nhead=2, mask=None, eps=1e-5):
    """x: (B, C, H, W) NCHW, like the PyTorch module. Returns list of NCHW."""
    if mask is not None:
        x = x * (1.0 - mask)
    B, C, H, W = x.shape
    S = H * W
    D = C
    # NCHW -> (B, S, C) token layout (single small transpose, inside the jit).
    tokens = jnp.transpose(x.reshape(B, C, S), (0, 2, 1)).astype(jnp.float32)

    folded = [_fold_layer_params(p, nhead=nhead) for p in layer_params]
    mats = jnp.stack([f[0] for f in folded], axis=0)   # (L, 2*nhead, D, D)
    vecs = jnp.stack([f[1] for f in folded], axis=0)   # (L, nhead+6, D)
    w1b1 = jnp.stack([f[2] for f in folded], axis=0)   # (L, D+1, F)
    w2t = jnp.stack([f[3] for f in folded], axis=0)    # (L, F, D)

    L = len(layer_params)
    F = w1b1.shape[-1]

    # Whole weight stacks, constant block index -> fetched into VMEM once,
    # every later copy is elided (block index never changes across the grid).
    def const_spec(shape):
        nd = len(shape)
        return pl.BlockSpec(shape, lambda b, l, _nd=nd: (0,) * _nd)

    out = pl.pallas_call(
        functools.partial(_teacher_stack_kernel,
                          nhead=nhead, d_model=D, eps=eps),
        out_shape=jax.ShapeDtypeStruct((L, B, S, D), jnp.float32),
        grid=(B, L),
        in_specs=[
            pl.BlockSpec((1, S, D), lambda b, l: (b, 0, 0)),   # tokens
            const_spec((L, 2 * nhead, D, D)),                  # mats
            const_spec((L, nhead + 6, D)),                     # vecs
            const_spec((L, D + 1, F)),                         # w1b1
            const_spec((L, F, D)),                             # w2
        ],
        out_specs=pl.BlockSpec((1, 1, S, D), lambda b, l: (l, b, 0, 0)),
        scratch_shapes=[pltpu.VMEM((S, D), jnp.float32)],
        compiler_params=pltpu.CompilerParams(
            dimension_semantics=("parallel", "arbitrary")),
    )(tokens, mats, vecs, w1b1, w2t)

    # One deferred layout conversion back to NCHW for the whole stack
    # (instead of a small transpose per stage).
    out_nchw = jnp.transpose(out, (0, 1, 3, 2)).reshape(L, B, C, H, W)
    return [out_nchw[i] for i in range(L)]


# ---------------------------------------------------------------------------
# Pure-JAX reference (mirrors PyTorch eval-mode semantics) for verification
# ---------------------------------------------------------------------------
def _layernorm_ref(x, w, b, eps):
    mu = jnp.mean(x, axis=-1, keepdims=True)
    var = jnp.mean((x - mu) ** 2, axis=-1, keepdims=True)
    return (x - mu) / jnp.sqrt(var + eps) * w + b


def _encoder_layer_ref(x, p, nhead, eps=1e-5):
    B, S, D = x.shape
    hd = D // nhead
    qkv = x @ p["in_proj_w"].T + p["in_proj_b"]
    q, k, v = jnp.split(qkv, 3, axis=-1)
    sh = lambda t: t.reshape(B, S, nhead, hd).transpose(0, 2, 1, 3)
    q, k, v = sh(q), sh(k), sh(v)
    s = jnp.einsum("bhqd,bhkd->bhqk", q, k) / math.sqrt(hd)
    a = jax.nn.softmax(s, axis=-1)
    o = jnp.einsum("bhqk,bhkd->bhqd", a, v).transpose(0, 2, 1, 3)
    o = o.reshape(B, S, D) @ p["out_proj_w"].T + p["out_proj_b"]
    x = _layernorm_ref(x + o, p["ln1_w"], p["ln1_b"], eps)
    f = jax.nn.relu(x @ p["w1"].T + p["b1"]) @ p["w2"].T + p["b2"]
    return _layernorm_ref(x + f, p["ln2_w"], p["ln2_b"], eps)


def _teacher_ref(x, layer_params, nhead=2, mask=None):
    if mask is not None:
        x = x * (1.0 - mask)
    B, C, H, W = x.shape
    t = jnp.transpose(x, (0, 2, 3, 1)).reshape(B, H * W, C)
    outs = []
    for p in layer_params:
        t = _encoder_layer_ref(t, p, nhead)
        outs.append(jnp.transpose(t.reshape(B, H, W, C), (0, 3, 1, 2)))
    return outs


# ---------------------------------------------------------------------------
# Deterministic parameter construction (shapes follow the PyTorch module)
# ---------------------------------------------------------------------------
def init_layer_params(key, d_model, dim_ff):
    ks = jax.random.split(key, 8)
    s = 0.05
    return dict(
        in_proj_w=s * jax.random.normal(ks[0], (3 * d_model, d_model), jnp.float32),
        in_proj_b=s * jax.random.normal(ks[1], (3 * d_model,), jnp.float32),
        out_proj_w=s * jax.random.normal(ks[2], (d_model, d_model), jnp.float32),
        out_proj_b=s * jax.random.normal(ks[3], (d_model,), jnp.float32),
        ln1_w=jnp.ones((d_model,), jnp.float32),
        ln1_b=jnp.zeros((d_model,), jnp.float32),
        ln2_w=jnp.ones((d_model,), jnp.float32),
        ln2_b=jnp.zeros((d_model,), jnp.float32),
        w1=s * jax.random.normal(ks[4], (dim_ff, d_model), jnp.float32),
        b1=s * jax.random.normal(ks[5], (dim_ff,), jnp.float32),
        w2=s * jax.random.normal(ks[6], (d_model, dim_ff), jnp.float32),
        b2=s * jax.random.normal(ks[7], (d_model,), jnp.float32),
    )


if __name__ == "__main__":
    # Small shapes consistent with the module:
    #   in_channels (d_model) = 8, nhead = 2, stages = 3, teacher_dim = 32
    #   input x: (B=2, C=8, H=8, W=8) -> seq = 64 tokens of dim 8
    B, C, H, W = 2, 8, 8, 8
    stages, teacher_dim, nhead = 3, 32, 2

    root = jax.random.PRNGKey(0)
    k_x, k_p = jax.random.split(root)
    x = jax.random.normal(k_x, (B, C, H, W), jnp.float32)
    layer_keys = jax.random.split(k_p, stages)
    layer_params = [init_layer_params(k, C, teacher_dim) for k in layer_keys]

    # NOTE: dropout layers are eval-mode identity (inference semantics).
    fwd = jax.jit(functools.partial(build_teacher_net_forward, nhead=nhead))
    outs = fwd(x, layer_params)
    outs = [jax.block_until_ready(o) for o in outs]

    refs = _teacher_ref(x, layer_params, nhead=nhead, mask=None)
    for o, r in zip(outs, refs):
        assert o.shape == (B, C, H, W)
        # tolerance absorbs the approx-reciprocal softmax and folded-weight
        # floating-point reassociation; structural errors would be O(1).
        np.testing.assert_allclose(np.asarray(o), np.asarray(r),
                                   rtol=1e-2, atol=1e-2)

    print("KERNEL_OK")
</pallas_src>

<mosaic_0001>
module attributes {stable_mosaic.version = 11 : i64} {
  func.func @_teacher_stack_kernel(%arg0: i32, %arg1: i32, %arg2: memref<1x64x8xf32, #tpu.memory_space<vmem>>, %arg3: memref<3x4x8x8xf32, #tpu.memory_space<vmem>>, %arg4: memref<3x8x8xf32, #tpu.memory_space<vmem>>, %arg5: memref<3x9x32xf32, #tpu.memory_space<vmem>>, %arg6: memref<3x32x8xf32, #tpu.memory_space<vmem>>, %arg7: memref<1x1x64x8xf32, #tpu.memory_space<vmem>>, %arg8: memref<64x8xf32, #tpu.memory_space<vmem>>) attributes {dimension_semantics = [#tpu.dimension_semantics<parallel>, #tpu.dimension_semantics<arbitrary>], iteration_bounds = array<i64: 2, 3>, scalar_prefetch = 0 : i64, scratch_operands = 1 : i64, tpu.core_type = #tpu.core_type<tc>, window_params = [{transform_indices = @transform_0, window_bounds = array<i64: 1, 64, 8>}, {pipeline_mode = #tpu.pipeline_mode<synchronous>, transform_indices = @transform_1, window_bounds = array<i64: 3, 4, 8, 8>}, {pipeline_mode = #tpu.pipeline_mode<synchronous>, transform_indices = @transform_2, window_bounds = array<i64: 3, 8, 8>}, {pipeline_mode = #tpu.pipeline_mode<synchronous>, transform_indices = @transform_3, window_bounds = array<i64: 3, 9, 32>}, {pipeline_mode = #tpu.pipeline_mode<synchronous>, transform_indices = @transform_4, window_bounds = array<i64: 3, 32, 8>}, {transform_indices = @transform_5, window_bounds = array<i64: 1, 1, 64, 8>}]} {
    %c0_i32 = arith.constant 0 : i32
    %0 = arith.cmpi eq, %arg1, %c0_i32 : i32
    %1 = arith.extui %0 : i1 to i32
    %c0_i32_0 = arith.constant 0 : i32
    %2 = arith.cmpi ne, %1, %c0_i32_0 : i32
    scf.if %2 {
      %c0_43 = arith.constant 0 : index
      %c0_44 = arith.constant 0 : index
      %c0_45 = arith.constant 0 : index
      %135 = vector.load %arg2[%c0_43, %c0_44, %c0_45] : memref<1x64x8xf32, #tpu.memory_space<vmem>>, vector<1x64x8xf32>
      %136 = vector.shape_cast %135 : vector<1x64x8xf32> to vector<64x8xf32>
      %c0_46 = arith.constant 0 : index
      %c0_47 = arith.constant 0 : index
      %137 = vector.load %arg8[%c0_46, %c0_47] : memref<64x8xf32, #tpu.memory_space<vmem>>, vector<64x8xf32>
      tpu.vector_store %arg8[%c0_46, %c0_47], %136 {strides = array<i32>} : memref<64x8xf32, #tpu.memory_space<vmem>>, vector<64x8xf32>,
    } else {
    }
    %c0 = arith.constant 0 : index
    %c0_1 = arith.constant 0 : index
    %3 = vector.load %arg8[%c0, %c0_1] : memref<64x8xf32, #tpu.memory_space<vmem>>, vector<64x8xf32>
    %4 = arith.index_cast %arg1 : i32 to index
    %c0_2 = arith.constant 0 : index
    %c0_3 = arith.constant 0 : index
    %c0_4 = arith.constant 0 : index
    %5 = vector.load %arg3[%4, %c0_2, %c0_3, %c0_4] : memref<3x4x8x8xf32, #tpu.memory_space<vmem>>, vector<1x4x8x8xf32>
    %6 = vector.shape_cast %5 : vector<1x4x8x8xf32> to vector<4x8x8xf32>
    %7 = arith.index_cast %arg1 : i32 to index
    %c0_5 = arith.constant 0 : index
    %c0_6 = arith.constant 0 : index
    %8 = vector.load %arg4[%7, %c0_5, %c0_6] : memref<3x8x8xf32, #tpu.memory_space<vmem>>, vector<1x8x8xf32>
    %9 = vector.shape_cast %8 : vector<1x8x8xf32> to vector<8x8xf32>
    %10 = arith.index_cast %arg1 : i32 to index
    %c0_7 = arith.constant 0 : index
    %c0_8 = arith.constant 0 : index
    %11 = vector.load %arg5[%10, %c0_7, %c0_8] : memref<3x9x32xf32, #tpu.memory_space<vmem>>, vector<1x9x32xf32>
    %12 = vector.shape_cast %11 : vector<1x9x32xf32> to vector<9x32xf32>
    %13 = arith.index_cast %arg1 : i32 to index
    %c0_9 = arith.constant 0 : index
    %c0_10 = arith.constant 0 : index
    %14 = vector.load %arg6[%13, %c0_9, %c0_10] : memref<3x32x8xf32, #tpu.memory_space<vmem>>, vector<1x32x8xf32>
    %15 = vector.shape_cast %14 : vector<1x32x8xf32> to vector<32x8xf32>
    %16 = vector.extract_strided_slice %9 {offsets = [0, 0], sizes = [2, 8], strides = [1, 1]} : vector<8x8xf32> to vector<2x8xf32>
    %17 = vector.extract_strided_slice %9 {offsets = [2, 0], sizes = [1, 8], strides = [1, 1]} : vector<8x8xf32> to vector<1x8xf32>
    %18 = vector.extract_strided_slice %9 {offsets = [3, 0], sizes = [1, 8], strides = [1, 1]} : vector<8x8xf32> to vector<1x8xf32>
    %19 = vector.extract_strided_slice %9 {offsets = [4, 0], sizes = [1, 8], strides = [1, 1]} : vector<8x8xf32> to vector<1x8xf32>
    %20 = vector.extract_strided_slice %9 {offsets = [5, 0], sizes = [1, 8], strides = [1, 1]} : vector<8x8xf32> to vector<1x8xf32>
    %21 = vector.extract_strided_slice %9 {offsets = [6, 0], sizes = [1, 8], strides = [1, 1]} : vector<8x8xf32> to vector<1x8xf32>
    %22 = vector.extract_strided_slice %9 {offsets = [7, 0], sizes = [1, 8], strides = [1, 1]} : vector<8x8xf32> to vector<1x8xf32>
    %23 = vector.extract_strided_slice %12 {offsets = [0, 0], sizes = [8, 32], strides = [1, 1]} : vector<9x32xf32> to vector<8x32xf32>
    %24 = vector.extract_strided_slice %12 {offsets = [8, 0], sizes = [1, 32], strides = [1, 1]} : vector<9x32xf32> to vector<1x32xf32>
    %cst = arith.constant dense<0.000000e+00> : vector<2x64xf32>
    %25 = tpu.matmul %16, %3, %cst {dimension_numbers = #tpu.dot_dimension_numbers<[1], [1], [0], [0], [0, 0, 1, 0], [], []>} : vector<2x8xf32>, vector<64x8xf32>, vector<2x64xf32> -> vector<2x64xf32>
    %cst_11 = arith.constant 0.000000e+00 : f32
    %26 = vector.broadcast %cst_11 : f32 to vector<64x8xf32>
    %27 = vector.extract_strided_slice %6 {offsets = [0, 0, 0], sizes = [1, 8, 8], strides = [1, 1, 1]} : vector<4x8x8xf32> to vector<1x8x8xf32>
    %28 = vector.shape_cast %27 : vector<1x8x8xf32> to vector<8x8xf32>
    %cst_12 = arith.constant dense<0.000000e+00> : vector<64x8xf32>
    %29 = tpu.matmul %3, %28, %cst_12 {dimension_numbers = #tpu.dot_dimension_numbers<[1], [0], [0], [1], [0, 0, 1, 1], [], []>} : vector<64x8xf32>, vector<8x8xf32>, vector<64x8xf32> -> vector<64x8xf32>
    %cst_13 = arith.constant dense<0.000000e+00> : vector<64x64xf32>
    %30 = tpu.matmul %29, %3, %cst_13 {dimension_numbers = #tpu.dot_dimension_numbers<[1], [1], [0], [0], [0, 0, 1, 0], [], []>} : vector<64x8xf32>, vector<64x8xf32>, vector<64x64xf32> -> vector<64x64xf32>
    %31 = vector.extract_strided_slice %25 {offsets = [0, 0], sizes = [1, 64], strides = [1, 1]} : vector<2x64xf32> to vector<1x64xf32>
    %32 = vector.broadcast %31 : vector<1x64xf32> to vector<64x64xf32>
    %33 = arith.addf %30, %32 : vector<64x64xf32>
    %cst_14 = arith.constant dense<0xFF800000> : vector<64xf32>
    %34 = vector.multi_reduction <maximumf>, %33, %cst_14 [1] : vector<64x64xf32> to vector<64xf32>
    %35 = vector.shape_cast %34 : vector<64xf32> to vector<64x1xf32>
    %36 = vector.broadcast %35 : vector<64x1xf32> to vector<64x64xf32>
    %37 = arith.subf %33, %36 : vector<64x64xf32>
    %38 = math.exp %37 : vector<64x64xf32>
    %cst_15 = arith.constant dense<0.000000e+00> : vector<64xf32>
    %39 = vector.multi_reduction <add>, %38, %cst_15 [1] : vector<64x64xf32> to vector<64xf32>
    %40 = vector.shape_cast %39 : vector<64xf32> to vector<64x1xf32>
    %41 = tpu.reciprocal %40 {approx = true} : vector<64x1xf32> -> vector<64x1xf32>
    %42 = vector.broadcast %41 : vector<64x1xf32> to vector<64x64xf32>
    %43 = arith.mulf %38, %42 : vector<64x64xf32>
    %44 = vector.extract_strided_slice %6 {offsets = [2, 0, 0], sizes = [1, 8, 8], strides = [1, 1, 1]} : vector<4x8x8xf32> to vector<1x8x8xf32>
    %45 = vector.shape_cast %44 : vector<1x8x8xf32> to vector<8x8xf32>
    %cst_16 = arith.constant dense<0.000000e+00> : vector<64x8xf32>
    %46 = tpu.matmul %3, %45, %cst_16 {dimension_numbers = #tpu.dot_dimension_numbers<[1], [0], [0], [1], [0, 0, 1, 1], [], []>} : vector<64x8xf32>, vector<8x8xf32>, vector<64x8xf32> -> vector<64x8xf32>
    %cst_17 = arith.constant dense<0.000000e+00> : vector<64x8xf32>
    %47 = tpu.matmul %43, %46, %cst_17 {dimension_numbers = #tpu.dot_dimension_numbers<[1], [0], [0], [1], [0, 0, 1, 1], [], []>} : vector<64x64xf32>, vector<64x8xf32>, vector<64x8xf32> -> vector<64x8xf32>
    %48 = arith.addf %26, %47 : vector<64x8xf32>
    %49 = vector.extract_strided_slice %6 {offsets = [1, 0, 0], sizes = [1, 8, 8], strides = [1, 1, 1]} : vector<4x8x8xf32> to vector<1x8x8xf32>
    %50 = vector.shape_cast %49 : vector<1x8x8xf32> to vector<8x8xf32>
    %cst_18 = arith.constant dense<0.000000e+00> : vector<64x8xf32>
    %51 = tpu.matmul %3, %50, %cst_18 {dimension_numbers = #tpu.dot_dimension_numbers<[1], [0], [0], [1], [0, 0, 1, 1], [], []>} : vector<64x8xf32>, vector<8x8xf32>, vector<64x8xf32> -> vector<64x8xf32>
    %cst_19 = arith.constant dense<0.000000e+00> : vector<64x64xf32>
    %52 = tpu.matmul %51, %3, %cst_19 {dimension_numbers = #tpu.dot_dimension_numbers<[1], [1], [0], [0], [0, 0, 1, 0], [], []>} : vector<64x8xf32>, vector<64x8xf32>, vector<64x64xf32> -> vector<64x64xf32>
    %53 = vector.extract_strided_slice %25 {offsets = [1, 0], sizes = [1, 64], strides = [1, 1]} : vector<2x64xf32> to vector<1x64xf32>
    %54 = vector.broadcast %53 : vector<1x64xf32> to vector<64x64xf32>
    %55 = arith.addf %52, %54 : vector<64x64xf32>
    %cst_20 = arith.constant dense<0xFF800000> : vector<64xf32>
    %56 = vector.multi_reduction <maximumf>, %55, %cst_20 [1] : vector<64x64xf32> to vector<64xf32>
    %57 = vector.shape_cast %56 : vector<64xf32> to vector<64x1xf32>
    %58 = vector.broadcast %57 : vector<64x1xf32> to vector<64x64xf32>
    %59 = arith.subf %55, %58 : vector<64x64xf32>
    %60 = math.exp %59 : vector<64x64xf32>
    %cst_21 = arith.constant dense<0.000000e+00> : vector<64xf32>
    %61 = vector.multi_reduction <add>, %60, %cst_21 [1] : vector<64x64xf32> to vector<64xf32>
    %62 = vector.shape_cast %61 : vector<64xf32> to vector<64x1xf32>
    %63 = tpu.reciprocal %62 {approx = true} : vector<64x1xf32> -> vector<64x1xf32>
    %64 = vector.broadcast %63 : vector<64x1xf32> to vector<64x64xf32>
    %65 = arith.mulf %60, %64 : vector<64x64xf32>
    %66 = vector.extract_strided_slice %6 {offsets = [3, 0, 0], sizes = [1, 8, 8], strides = [1, 1, 1]} : vector<4x8x8xf32> to vector<1x8x8xf32>
    %67 = vector.shape_cast %66 : vector<1x8x8xf32> to vector<8x8xf32>
    %cst_22 = arith.constant dense<0.000000e+00> : vector<64x8xf32>
    %68 = tpu.matmul %3, %67, %cst_22 {dimension_numbers = #tpu.dot_dimension_numbers<[1], [0], [0], [1], [0, 0, 1, 1], [], []>} : vector<64x8xf32>, vector<8x8xf32>, vector<64x8xf32> -> vector<64x8xf32>
    %cst_23 = arith.constant dense<0.000000e+00> : vector<64x8xf32>
    %69 = tpu.matmul %65, %68, %cst_23 {dimension_numbers = #tpu.dot_dimension_numbers<[1], [0], [0], [1], [0, 0, 1, 1], [], []>} : vector<64x64xf32>, vector<64x8xf32>, vector<64x8xf32> -> vector<64x8xf32>
    %70 = arith.addf %48, %69 : vector<64x8xf32>
    %71 = vector.broadcast %17 : vector<1x8xf32> to vector<64x8xf32>
    %72 = arith.addf %70, %71 : vector<64x8xf32>
    %73 = arith.addf %3, %72 : vector<64x8xf32>
    %cst_24 = arith.constant dense<0.000000e+00> : vector<64xf32>
    %74 = vector.multi_reduction <add>, %73, %cst_24 [1] : vector<64x8xf32> to vector<64xf32>
    %75 = vector.shape_cast %74 : vector<64xf32> to vector<64x1xf32>
    %cst_25 = arith.constant 8.000000e+00 : f32
    %76 = vector.broadcast %cst_25 : f32 to vector<64x1xf32>
    %77 = arith.divf %75, %76 : vector<64x1xf32>
    %78 = vector.broadcast %77 : vector<64x1xf32> to vector<64x8xf32>
    %79 = arith.subf %73, %78 : vector<64x8xf32>
    %80 = vector.broadcast %77 : vector<64x1xf32> to vector<64x8xf32>
    %81 = arith.subf %73, %80 : vector<64x8xf32>
    %82 = arith.mulf %79, %81 : vector<64x8xf32>
    %cst_26 = arith.constant dense<0.000000e+00> : vector<64xf32>
    %83 = vector.multi_reduction <add>, %82, %cst_26 [1] : vector<64x8xf32> to vector<64xf32>
    %84 = vector.shape_cast %83 : vector<64xf32> to vector<64x1xf32>
    %cst_27 = arith.constant 8.000000e+00 : f32
    %85 = vector.broadcast %cst_27 : f32 to vector<64x1xf32>
    %86 = arith.divf %84, %85 : vector<64x1xf32>
    %87 = vector.broadcast %77 : vector<64x1xf32> to vector<64x8xf32>
    %88 = arith.subf %73, %87 : vector<64x8xf32>
    %cst_28 = arith.constant 9.99999974E-6 : f32
    %89 = vector.broadcast %cst_28 : f32 to vector<64x1xf32>
    %90 = arith.addf %86, %89 : vector<64x1xf32>
    %91 = math.rsqrt %90 : vector<64x1xf32>
    %92 = vector.broadcast %91 : vector<64x1xf32> to vector<64x8xf32>
    %93 = arith.mulf %88, %92 : vector<64x8xf32>
    %94 = vector.broadcast %18 : vector<1x8xf32> to vector<64x8xf32>
    %95 = arith.mulf %93, %94 : vector<64x8xf32>
    %96 = vector.broadcast %19 : vector<1x8xf32> to vector<64x8xf32>
    %97 = arith.addf %95, %96 : vector<64x8xf32>
    %cst_29 = arith.constant dense<0.000000e+00> : vector<64x32xf32>
    %98 = tpu.matmul %97, %23, %cst_29 {dimension_numbers = #tpu.dot_dimension_numbers<[1], [0], [0], [1], [0, 0, 1, 1], [], []>} : vector<64x8xf32>, vector<8x32xf32>, vector<64x32xf32> -> vector<64x32xf32>
    %99 = vector.broadcast %24 : vector<1x32xf32> to vector<64x32xf32>
    %100 = arith.addf %98, %99 : vector<64x32xf32>
    %cst_30 = arith.constant 0.000000e+00 : f32
    %101 = vector.broadcast %cst_30 : f32 to vector<64x32xf32>
    %102 = arith.maximumf %100, %101 : vector<64x32xf32>
    %cst_31 = arith.constant dense<0.000000e+00> : vector<64x8xf32>
    %103 = tpu.matmul %102, %15, %cst_31 {dimension_numbers = #tpu.dot_dimension_numbers<[1], [0], [0], [1], [0, 0, 1, 1], [], []>} : vector<64x32xf32>, vector<32x8xf32>, vector<64x8xf32> -> vector<64x8xf32>
    %104 = vector.broadcast %20 : vector<1x8xf32> to vector<64x8xf32>
    %105 = arith.addf %103, %104 : vector<64x8xf32>
    %106 = arith.addf %97, %105 : vector<64x8xf32>
    %cst_32 = arith.constant dense<0.000000e+00> : vector<64xf32>
    %107 = vector.multi_reduction <add>, %106, %cst_32 [1] : vector<64x8xf32> to vector<64xf32>
    %108 = vector.shape_cast %107 : vector<64xf32> to vector<64x1xf32>
    %cst_33 = arith.constant 8.000000e+00 : f32
    %109 = vector.broadcast %cst_33 : f32 to vector<64x1xf32>
    %110 = arith.divf %108, %109 : vector<64x1xf32>
    %111 = vector.broadcast %110 : vector<64x1xf32> to vector<64x8xf32>
    %112 = arith.subf %106, %111 : vector<64x8xf32>
    %113 = vector.broadcast %110 : vector<64x1xf32> to vector<64x8xf32>
    %114 = arith.subf %106, %113 : vector<64x8xf32>
    %115 = arith.mulf %112, %114 : vector<64x8xf32>
    %cst_34 = arith.constant dense<0.000000e+00> : vector<64xf32>
    %116 = vector.multi_reduction <add>, %115, %cst_34 [1] : vector<64x8xf32> to vector<64xf32>
    %117 = vector.shape_cast %116 : vector<64xf32> to vector<64x1xf32>
    %cst_35 = arith.constant 8.000000e+00 : f32
    %118 = vector.broadcast %cst_35 : f32 to vector<64x1xf32>
    %119 = arith.divf %117, %118 : vector<64x1xf32>
    %120 = vector.broadcast %110 : vector<64x1xf32> to vector<64x8xf32>
    %121 = arith.subf %106, %120 : vector<64x8xf32>
    %cst_36 = arith.constant 9.99999974E-6 : f32
    %122 = vector.broadcast %cst_36 : f32 to vector<64x1xf32>
    %123 = arith.addf %119, %122 : vector<64x1xf32>
    %124 = math.rsqrt %123 : vector<64x1xf32>
    %125 = vector.broadcast %124 : vector<64x1xf32> to vector<64x8xf32>
    %126 = arith.mulf %121, %125 : vector<64x8xf32>
    %127 = vector.broadcast %21 : vector<1x8xf32> to vector<64x8xf32>
    %128 = arith.mulf %126, %127 : vector<64x8xf32>
    %129 = vector.broadcast %22 : vector<1x8xf32> to vector<64x8xf32>
    %130 = arith.addf %128, %129 : vector<64x8xf32>
    %c0_37 = arith.constant 0 : index
    %c0_38 = arith.constant 0 : index
    %131 = vector.load %arg8[%c0_37, %c0_38] : memref<64x8xf32, #tpu.memory_space<vmem>>, vector<64x8xf32>
    tpu.vector_store %arg8[%c0_37, %c0_38], %130 {strides = array<i32>} : memref<64x8xf32, #tpu.memory_space<vmem>>, vector<64x8xf32>,
    %c0_39 = arith.constant 0 : index
    %c0_40 = arith.constant 0 : index
    %c0_41 = arith.constant 0 : index
    %c0_42 = arith.constant 0 : index
    %132 = vector.load %arg7[%c0_39, %c0_40, %c0_41, %c0_42] : memref<1x1x64x8xf32, #tpu.memory_space<vmem>>, vector<1x1x64x8xf32>
    %133 = vector.shape_cast %132 : vector<1x1x64x8xf32> to vector<64x8xf32>
    %134 = vector.shape_cast %130 : vector<64x8xf32> to vector<1x1x64x8xf32>
    tpu.vector_store %arg7[%c0_39, %c0_40, %c0_41, %c0_42], %134 {strides = array<i32>} : memref<1x1x64x8xf32, #tpu.memory_space<vmem>>, vector<1x1x64x8xf32>,
    return
  }
  func.func @transform_0(%arg0: i32, %arg1: i32) -> (i32, i32, i32) {
    %c0_i32 = arith.constant 0 : i32
    %c0_i32_0 = arith.constant 0 : i32
    %c0_i32_1 = arith.constant 0 : i32
    return %arg0, %c0_i32, %c0_i32_0 : i32, i32, i32
  }
  func.func @transform_1(%arg0: i32, %arg1: i32) -> (i32, i32, i32, i32) {
    %c0_i32 = arith.constant 0 : i32
    %c0_i32_0 = arith.constant 0 : i32
    %c0_i32_1 = arith.constant 0 : i32
    %c0_i32_2 = arith.constant 0 : i32
    %c0_i32_3 = arith.constant 0 : i32
    return %c0_i32, %c0_i32_0, %c0_i32_1, %c0_i32_2 : i32, i32, i32, i32
  }
  func.func @transform_2(%arg0: i32, %arg1: i32) -> (i32, i32, i32) {
    %c0_i32 = arith.constant 0 : i32
    %c0_i32_0 = arith.constant 0 : i32
    %c0_i32_1 = arith.constant 0 : i32
    %c0_i32_2 = arith.constant 0 : i32
    return %c0_i32, %c0_i32_0, %c0_i32_1 : i32, i32, i32
  }
  func.func @transform_3(%arg0: i32, %arg1: i32) -> (i32, i32, i32) {
    %c0_i32 = arith.constant 0 : i32
    %c0_i32_0 = arith.constant 0 : i32
    %c0_i32_1 = arith.constant 0 : i32
    %c0_i32_2 = arith.constant 0 : i32
    return %c0_i32, %c0_i32_0, %c0_i32_1 : i32, i32, i32
  }
  func.func @transform_4(%arg0: i32, %arg1: i32) -> (i32, i32, i32) {
    %c0_i32 = arith.constant 0 : i32
    %c0_i32_0 = arith.constant 0 : i32
    %c0_i32_1 = arith.constant 0 : i32
    %c0_i32_2 = arith.constant 0 : i32
    return %c0_i32, %c0_i32_0, %c0_i32_1 : i32, i32, i32
  }
  func.func @transform_5(%arg0: i32, %arg1: i32) -> (i32, i32, i32, i32) {
    %c0_i32 = arith.constant 0 : i32
    %c0_i32_0 = arith.constant 0 : i32
    %c0_i32_1 = arith.constant 0 : i32
    return %arg1, %arg0, %c0_i32, %c0_i32_0 : i32, i32, i32, i32
  }
}

</mosaic_0001>

<llo_original>
// kernel: build_teacher_net_forward.1
$region0: #{build_teacher_net_forward.1}
  #allocation0 [shape = 'u32[]', space=smem, size = 0x4, offset = 0x4, fixed_abs, tag = 'smem constant byte address 0x4 - core index']
  #allocation1 [shape = 'u32[144,128]{1,0:T(1,128)}', space=vmem, size = 0x12000, scoped, tag = 'internal scratch']
  #allocation2 [shape = 'f32[64,8]{1,0:T(8,128)}', space=vmem, size = 0x8000, scoped, tag = 'scratch operand']
  %s0 = inlined_call_operand.vmem [shape: f32[2,64,8], index: 0, kind: input, shape index: {}]
  %s1 = inlined_call_operand.vmem [shape: f32[3,4,8,8], index: 1, kind: input, shape index: {}]
  %s2 = inlined_call_operand.vmem [shape: f32[3,8,8], index: 2, kind: input, shape index: {}]
  %s3 = inlined_call_operand.vmem [shape: f32[3,9,32], index: 3, kind: input, shape index: {}]
  %s4 = inlined_call_operand.vmem [shape: f32[3,32,8], index: 4, kind: input, shape index: {}]
  %s5 = inlined_call_operand.vmem [shape: f32[3,2,64,8], index: 5, kind: output, shape index: {}]
  %s6 = sld [smem:[#allocation0]]
  $region57: #{build_teacher_net_forward.1} parent=0
    _
  %s8 = ssub.s32 1, %s6
  %s9 = scalar_select 0, %s8, %s6
  loop: start=0, step=1, limit=8
  $region2: #{build_teacher_net_forward.1} parent=0 // loop_pre_header
    _
  $region3: #{build_teacher_net_forward.1} parent=0 // loop_header
    %s11 = sphi 0, %s15
    %p12 = scmp.ge.s32.totalorder %s11, 8
    %s18 = sphi 0, %s30
    %s19 = sphi 0, %s26
    %s20 = sphi 0, %s18
    %s21 = sphi 0, %s19
    %s22 = sphi 0, %s20
    %s23 = sphi 0, %s21
    %s33 = sphi 0, %s35
    %s36 = sphi 0, %s33
    %s37 = sphi 0, %s36
    %s53 = sphi 0, %s37
    %s57 = sphi 0, %s57
    %s59 = sphi 0, %s57
    %s60 = sphi 0, %s59
    %s74 = sphi 0, %s60
    %s78 = sphi 0, %s78
    %s80 = sphi 0, %s78
    %s81 = sphi 0, %s80
    %s95 = sphi 0, %s81
    %s99 = sphi 0, %s99
    %s101 = sphi 0, %s99
    %s102 = sphi 0, %s101
    %s116 = sphi 0, %s102
    %s120 = sphi 0, %s120
    %s122 = sphi 0, %s120
    %s123 = sphi 0, %s122
    %s137 = sphi 0, %s123
    %s145 = sphi 0, %s147
    %s148 = sphi 0, %s145
    %s149 = sphi 0, %s148
    %s165 = sphi 0, %s149
  $region4: #{build_teacher_net_forward.1} parent=0 // loop_header_branch
    %14 = sbr.rel (%p12) target = $region8
  $region5: #{build_teacher_net_forward.1} parent=0 // loop_body
    %s16 = ssub.s32 %s11, 1
    %s17 = ssub.s32 %s11, 2
    %s24 = sadd.s32 1, %s19
    %p25 = scmp.ge.s32.totalorder %s24, 3
    %s26 = scalar_select %p25, 0, %s24
    %s27 = sadd.s32 1, %s18
    %s28 = scalar_select %p25, %s27, %s18
    %p29 = scmp.ge.s32.totalorder %s28, 2
    %s30 = scalar_select %p29, 0, %s28
    %s31 = ssub.s32 %s18, %s30
    %p32 = scmp.eq.s32.totalorder %s31, 0
    %s34 = sadd.s32 %s33, 1
    %s35 = scalar_select %p32, %s33, %s34
    %p38 = pneg %p32
    %p39 = scmp.eq.s32.totalorder %s11, 5
    %p40 = por %p38, %p39
    %p41 = scmp.ne.s32.totalorder %s33, %s36
    %p42 = scmp.eq.s32.totalorder %s11, 0
    %p43 = por %p41, %p42
    %p44 = scmp.ne.s32.totalorder %s33, %s36
    %p45 = scmp.eq.s32.totalorder %s16, 5
    %p46 = por %p44, %p45
    %p47 = scmp.ne.s32.totalorder %s36, %s37
    %p48 = scmp.eq.s32.totalorder %s16, 0
    %p49 = por %p47, %p48
    %p50 = scmp.ne.s32.totalorder %s36, %s37
    %p51 = scmp.eq.s32.totalorder %s17, 5
    %p52 = por %p50, %p51
    %p54 = scmp.ne.s32.totalorder %s37, %s53
    %p55 = scmp.eq.s32.totalorder %s17, 0
    %p56 = por %p54, %p55
    %s58 = sadd.s32 %s57, 1
    %p61 = scmp.eq.s32.totalorder %s11, 5
    %p62 = scmp.ne.s32.totalorder %s57, %s59
    %p63 = scmp.eq.s32.totalorder %s11, 0
    %p64 = por %p62, %p63
    %p65 = scmp.ne.s32.totalorder %s57, %s59
    %p66 = scmp.eq.s32.totalorder %s16, 5
    %p67 = por %p65, %p66
    %p68 = scmp.ne.s32.totalorder %s59, %s60
    %p69 = scmp.eq.s32.totalorder %s16, 0
    %p70 = por %p68, %p69
    %p71 = scmp.ne.s32.totalorder %s59, %s60
    %p72 = scmp.eq.s32.totalorder %s17, 5
    %p73 = por %p71, %p72
    %p75 = scmp.ne.s32.totalorder %s60, %s74
    %p76 = scmp.eq.s32.totalorder %s17, 0
    %p77 = por %p75, %p76
    %s79 = sadd.s32 %s78, 1
    %p82 = scmp.eq.s32.totalorder %s11, 5
    %p83 = scmp.ne.s32.totalorder %s78, %s80
    %p84 = scmp.eq.s32.totalorder %s11, 0
    %p85 = por %p83, %p84
    %p86 = scmp.ne.s32.totalorder %s78, %s80
    %p87 = scmp.eq.s32.totalorder %s16, 5
    %p88 = por %p86, %p87
    %p89 = scmp.ne.s32.totalorder %s80, %s81
    %p90 = scmp.eq.s32.totalorder %s16, 0
    %p91 = por %p89, %p90
    %p92 = scmp.ne.s32.totalorder %s80, %s81
    %p93 = scmp.eq.s32.totalorder %s17, 5
    %p94 = por %p92, %p93
    %p96 = scmp.ne.s32.totalorder %s81, %s95
    %p97 = scmp.eq.s32.totalorder %s17, 0
    %p98 = por %p96, %p97
    %s100 = sadd.s32 %s99, 1
    %p103 = scmp.eq.s32.totalorder %s11, 5
    %p104 = scmp.ne.s32.totalorder %s99, %s101
    %p105 = scmp.eq.s32.totalorder %s11, 0
    %p106 = por %p104, %p105
    %p107 = scmp.ne.s32.totalorder %s99, %s101
    %p108 = scmp.eq.s32.totalorder %s16, 5
    %p109 = por %p107, %p108
    %p110 = scmp.ne.s32.totalorder %s101, %s102
    %p111 = scmp.eq.s32.totalorder %s16, 0
    %p112 = por %p110, %p111
    %p113 = scmp.ne.s32.totalorder %s101, %s102
    %p114 = scmp.eq.s32.totalorder %s17, 5
    %p115 = por %p113, %p114
    %p117 = scmp.ne.s32.totalorder %s102, %s116
    %p118 = scmp.eq.s32.totalorder %s17, 0
    %p119 = por %p117, %p118
    %s121 = sadd.s32 %s120, 1
    %p124 = scmp.eq.s32.totalorder %s11, 5
    %p125 = scmp.ne.s32.totalorder %s120, %s122
    %p126 = scmp.eq.s32.totalorder %s11, 0
    %p127 = por %p125, %p126
    %p128 = scmp.ne.s32.totalorder %s120, %s122
    %p129 = scmp.eq.s32.totalorder %s16, 5
    %p130 = por %p128, %p129
    %p131 = scmp.ne.s32.totalorder %s122, %s123
    %p132 = scmp.eq.s32.totalorder %s16, 0
    %p133 = por %p131, %p132
    %p134 = scmp.ne.s32.totalorder %s122, %s123
    %p135 = scmp.eq.s32.totalorder %s17, 5
    %p136 = por %p134, %p135
    %p138 = scmp.ne.s32.totalorder %s123, %s137
    %p139 = scmp.eq.s32.totalorder %s17, 0
    %p140 = por %p138, %p139
    %s141 = ssub.s32 %s19, %s26
    %s142 = ssub.s32 %s18, %s30
    %s143 = sor.u32 %s141, %s142
    %p144 = scmp.eq.s32.totalorder %s143, 0
    %s146 = sadd.s32 %s145, 1
    %s147 = scalar_select %p144, %s145, %s146
    %p150 = pneg %p144
    %p151 = scmp.eq.s32.totalorder %s11, 5
    %p152 = por %p150, %p151
    %p153 = scmp.ne.s32.totalorder %s145, %s148
    %p154 = scmp.eq.s32.totalorder %s11, 0
    %p155 = por %p153, %p154
    %p156 = scmp.ne.s32.totalorder %s145, %s148
    %p157 = scmp.eq.s32.totalorder %s16, 5
    %p158 = por %p156, %p157
    %p159 = scmp.ne.s32.totalorder %s148, %s149
    %p160 = scmp.eq.s32.totalorder %s16, 0
    %p161 = por %p159, %p160
    %p162 = scmp.ne.s32.totalorder %s148, %s149
    %p163 = scmp.eq.s32.totalorder %s17, 5
    %p164 = por %p162, %p163
    %p166 = scmp.ne.s32.totalorder %s149, %s165
    %p167 = scmp.eq.s32.totalorder %s17, 0
    %p168 = por %p166, %p167
    %p169 = scmp.le.s32.totalorder 1, %s11
    %p170 = scmp.lt.s32.totalorder %s11, 7
    %p171 = pnand %p169, %p170
    %p172 = pneg %p171
    // Predicated region
    $region9: #{build_teacher_net_forward.1} parent=5 // pred_check
      _
    $region10: #{build_teacher_net_forward.1} parent=5 // pred_check_branch
      %174 = sbr.rel (%p171) target = $region12
    $region11: #{build_teacher_net_forward.1} parent=5 // pred_region
      %s175 = ssub.s32 %s11, 1
      // Predicated region
      $region13: #{build_teacher_net_forward.1} parent=11 // pred_check
        %p176 = pneg %p70
      $region14: #{build_teacher_net_forward.1} parent=11 // pred_check_branch
        %178 = sbr.rel (%p176) target = $region16
      $region15: #{build_teacher_net_forward.1} parent=11 // pred_region
        _
      $region16: #{build_teacher_net_forward.1} parent=11 // pred_fallthru
        _
      // Predicated region
      $region17: #{build_teacher_net_forward.1} parent=11 // pred_check
        %p179 = pneg %p91
      $region18: #{build_teacher_net_forward.1} parent=11 // pred_check_branch
        %181 = sbr.rel (%p179) target = $region20
      $region19: #{build_teacher_net_forward.1} parent=11 // pred_region
        _
      $region20: #{build_teacher_net_forward.1} parent=11 // pred_fallthru
        _
      // Predicated region
      $region21: #{build_teacher_net_forward.1} parent=11 // pred_check
        %p182 = pneg %p112
      $region22: #{build_teacher_net_forward.1} parent=11 // pred_check_branch
        %184 = sbr.rel (%p182) target = $region24
      $region23: #{build_teacher_net_forward.1} parent=11 // pred_region
        _
      $region24: #{build_teacher_net_forward.1} parent=11 // pred_fallthru
        _
      // Predicated region
      $region25: #{build_teacher_net_forward.1} parent=11 // pred_check
        %p185 = pneg %p133
      $region26: #{build_teacher_net_forward.1} parent=11 // pred_check_branch
        %187 = sbr.rel (%p185) target = $region28
      $region27: #{build_teacher_net_forward.1} parent=11 // pred_region
        _
      $region28: #{build_teacher_net_forward.1} parent=11 // pred_fallthru
        _
    $region12: #{build_teacher_net_forward.1} parent=5 // pred_fallthru
      _
    %p188 = scmp.lt.s32.totalorder %s11, 6
    // Predicated region
    $region29: #{build_teacher_net_forward.1} parent=5 // pred_check
      %p189 = pneg %p188
    $region30: #{build_teacher_net_forward.1} parent=5 // pred_check_branch
      %191 = sbr.rel (%p189) target = $region32
    $region31: #{build_teacher_net_forward.1} parent=5 // pred_region
      // Predicated region
      $region33: #{build_teacher_net_forward.1} parent=31 // pred_check
        %p192 = pneg %p43
      $region34: #{build_teacher_net_forward.1} parent=31 // pred_check_branch
        %194 = sbr.rel (%p192) target = $region36
      $region35: #{build_teacher_net_forward.1} parent=31 // pred_region
        %p195 = scmp.lt.s32.totalorder %s18, 1
        %s196 = scalar_select %p195, %s18, 1
        %s197 = smul.addr %s196, 8
        %s198 = smul.addr %s197, 8
        %s199 = scalar_lea.vmem %s0, %s198
      $region36: #{build_teacher_net_forward.1} parent=31 // pred_fallthru
        _
    $region32: #{build_teacher_net_forward.1} parent=5 // pred_fallthru
      _
    %p200 = scmp.le.s32.totalorder 1, %s11
    %p201 = scmp.lt.s32.totalorder %s11, 7
    %p202 = pnand %p200, %p201
    %p203 = pneg %p202
    // Predicated region
    $region37: #{build_teacher_net_forward.1} parent=5 // pred_check
      _
    $region38: #{build_teacher_net_forward.1} parent=5 // pred_check_branch
      %205 = sbr.rel (%p202) target = $region40
    $region39: #{build_teacher_net_forward.1} parent=5 // pred_region
      %s206 = ssub.s32 %s11, 1
      %p207 = scmp.lt.s32.totalorder %s20, 1
      %s208 = scalar_select %p207, %s20, 1
      %s209 = smul.addr %s208, 8
      %s210 = smul.addr %s209, 8
      %s211 = scalar_lea.vmem %s0, %s210
      %p212 = pneg %p49
      %p213 = pneg %p46
      %p214 = pneg %p70
      %p215 = pneg %p67
      %p216 = pneg %p91
      %p217 = pneg %p88
      %p218 = pneg %p112
      %p219 = pneg %p109
      %p220 = pneg %p133
      %p221 = pneg %p130
      %p222 = pneg %p161
      %p223 = pneg %p158
      %p224 = scmp.lt.s32.totalorder %s21, 2
      %s225 = scalar_select %p224, %s21, 2
      %p226 = scmp.lt.s32.totalorder %s20, 1
      %s227 = scalar_select %p226, %s20, 1
      %s228 = smul.addr %s227, 8
      %s229 = smul.addr %s225, 16
      %s230 = sadd.s32 %s228, %s229
      %s231 = smul.addr %s230, 8
      %s232 = scalar_lea.vmem %s5, %s231
      %p233 = scmp.lt.s32.totalorder %s20, 1
      %s234 = scalar_select %p233, %s20, 1
      %s235 = smul.addr %s234, 8
      %s236 = smul.addr %s235, 8
      %s237 = scalar_lea.vmem %s0, %s236
      %p238 = scmp.lt.s32.totalorder %s21, 2
      %s239 = scalar_select %p238, %s21, 2
      %p240 = scmp.lt.s32.totalorder %s20, 1
      %s241 = scalar_select %p240, %s20, 1
      %s242 = smul.addr %s241, 8
      %s243 = smul.addr %s239, 16
      %s244 = sadd.s32 %s242, %s243
      %s245 = smul.addr %s244, 8
      %s246 = scalar_lea.vmem %s5, %s245
      %p247 = scmp.eq.s32.totalorder %s21, 0
      // Predicated region
      $region41: #{build_teacher_net_forward.1} parent=39 // pred_check
        %p248 = pneg %p247
      $region42: #{build_teacher_net_forward.1} parent=39 // pred_check_branch
        %250 = sbr.rel (%p248) target = $region44
      $region43: #{build_teacher_net_forward.1} parent=39 // pred_region
        %v251 = vld [vmem:[%s237] sm:$0xff]
        %v252 = vld [vmem:[%s237 + $0x8] sm:$0xff]
        %v253 = vld [vmem:[%s237 + $0x10] sm:$0xff]
        %v254 = vld [vmem:[%s237 + $0x18] sm:$0xff]
        %v255 = vld [vmem:[%s237 + $0x20] sm:$0xff]
        %v256 = vld [vmem:[%s237 + $0x28] sm:$0xff]
        %v257 = vld [vmem:[%s237 + $0x30] sm:$0xff]
        %v258 = vld [vmem:[%s237 + $0x38] sm:$0xff]
        %vm259 = vcmask 64512
        %260 = vst.msk [vmem:[#allocation2] sm:$0xff] %vm259, %v251
        %261 = vst.msk [vmem:[#allocation2 + $0x8] sm:$0xff] %vm259, %v252
        %262 = vst.msk [vmem:[#allocation2 + $0x10] sm:$0xff] %vm259, %v253
        %263 = vst.msk [vmem:[#allocation2 + $0x18] sm:$0xff] %vm259, %v254
        %264 = vst.msk [vmem:[#allocation2 + $0x20] sm:$0xff] %vm259, %v255
        %265 = vst.msk [vmem:[#allocation2 + $0x28] sm:$0xff] %vm259, %v256
        %266 = vst.msk [vmem:[#allocation2 + $0x30] sm:$0xff] %vm259, %v257
        %267 = vst.msk [vmem:[#allocation2 + $0x38] sm:$0xff] %vm259, %v258
      $region44: #{build_teacher_net_forward.1} parent=39 // pred_fallthru
        _
      %v268 = vld [vmem:[#allocation2] sm:$0xff]
      %v269 = vld [vmem:[#allocation2 + $0x8] sm:$0xff]
      %v270 = vld [vmem:[#allocation2 + $0x10] sm:$0xff]
      %v271 = vld [vmem:[#allocation2 + $0x18] sm:$0xff]
      %v272 = vld [vmem:[#allocation2 + $0x20] sm:$0xff]
      %v273 = vld [vmem:[#allocation2 + $0x28] sm:$0xff]
      %v274 = vld [vmem:[#allocation2 + $0x30] sm:$0xff]
      %v275 = vld [vmem:[#allocation2 + $0x38] sm:$0xff]
      %s276 = smul.u32 %s21, 32
      %s277 = scalar_lea.vmem %s1, %s276
      %v278 = vld [vmem:[%s277] sm:$0xff]
      %v279 = vld [vmem:[%s277 + $0x8] sm:$0xff]
      %v280 = vld [vmem:[%s277 + $0x10] sm:$0xff]
      %v281 = vld [vmem:[%s277 + $0x18] sm:$0xff]
      %s282 = smul.u32 %s21, 8
      %s283 = scalar_lea.vmem %s2, %s282
      %v284 = vld [vmem:[%s283] sm:$0xff]
      %s285 = smul.u32 %s21, 16
      %s286 = scalar_lea.vmem %s3, %s285
      %v287 = vld [vmem:[%s286] sm:$0xff]
      %v288 = vld [vmem:[%s286 + $0x8] sm:$0x1]
      %s289 = scalar_lea.vmem %s4, %s276
      %v290 = vld [vmem:[%s289] sm:$0xff]
      %v291 = vld [vmem:[%s289 + $0x8] sm:$0xff]
      %v292 = vld [vmem:[%s289 + $0x10] sm:$0xff]
      %v293 = vld [vmem:[%s289 + $0x18] sm:$0xff]
      %vm294 = vcmask 64512
      %v296 = vsel %vm294, %v284, 0
      %v299 = vsel %vm294, %v268, 0
      %v302 = vsel %vm294, %v269, 0
      %v305 = vsel %vm294, %v270, 0
      %v308 = vsel %vm294, %v271, 0
      %v311 = vsel %vm294, %v272, 0
      %v314 = vsel %vm294, %v273, 0
      %v317 = vsel %vm294, %v274, 0
      %v320 = vsel %vm294, %v275, 0
      %322 = vmatprep.subr.mxu0 0.0
      %323 = vmatpush1.xpose.msra.mxu0 0.0
      %324 = vmatprep.subr.mxu0 0.0
      %325 = vmatpush1.xpose.msra.mxu0 0.0
      %326 = vmatprep.subr.mxu0 0.0
      %327 = vmatpush1.xpose.msra.mxu0 0.0
      %328 = vmatprep.subr.mxu0 0.0
      %329 = vmatpush1.xpose.msra.mxu0 0.0
      %330 = vmatprep.subr.mxu0 0.0
      %331 = vmatpush1.xpose.msra.mxu0 0.0
      %332 = vmatprep.subr.mxu0 0.0
      %333 = vmatpush1.xpose.msra.mxu0 0.0
      %334 = vmatprep.subr.mxu0 0.0
      %335 = vmatpush1.xpose.msra.mxu0 0.0
      %336 = vmatprep.subr.mxu0 0.0
      %337 = vmatpush1.xpose.msra.mxu0 0.0
      %338 = vmatprep.subr.mxu0 0.0
      %339 = vmatpush1.xpose.msra.mxu0 %v320
      %340 = vmatprep.subr.mxu0 0.0
      %341 = vmatpush1.xpose.msra.mxu0 %v317
      %342 = vmatprep.subr.mxu0 0.0
      %343 = vmatpush1.xpose.msra.mxu0 %v314
      %344 = vmatprep.subr.mxu0 0.0
      %345 = vmatpush1.xpose.msra.mxu0 %v311
      %346 = vmatprep.subr.mxu0 0.0
      %347 = vmatpush1.xpose.msra.mxu0 %v308
      %348 = vmatprep.subr.mxu0 0.0
      %349 = vmatpush1.xpose.msra.mxu0 %v305
      %350 = vmatprep.subr.mxu0 0.0
      %351 = vmatpush1.xpose.msra.mxu0 %v302
      %352 = vmatprep.subr.mxu0 0.0
      %353 = vmatpush1.xpose.msra.mxu0 %v299
      %354 = vmatprep.subr.mxu0 0.0
      %355 = vmatpush2.xpose.msra.mxu0 0.0
      %356 = vmatprep.subr.mxu0 0.0
      %357 = vmatpush2.xpose.msra.mxu0 0.0
      %358 = vmatprep.subr.mxu0 0.0
      %359 = vmatpush2.xpose.msra.mxu0 0.0
      %360 = vmatprep.subr.mxu0 0.0
      %361 = vmatpush2.xpose.msra.mxu0 0.0
      %362 = vmatprep.subr.mxu0 0.0
      %363 = vmatpush2.xpose.msra.mxu0 0.0
      %364 = vmatprep.subr.mxu0 0.0
      %365 = vmatpush2.xpose.msra.mxu0 0.0
      %366 = vmatprep.subr.mxu0 0.0
      %367 = vmatpush2.xpose.msra.mxu0 0.0
      %368 = vmatprep.subr.mxu0 0.0
      %369 = vmatpush2.xpose.msra.mxu0 0.0
      %370 = vmatprep.subr.mxu0 0.0
      %371 = vmatpush2.xpose.msra.mxu0 0.0
      %372 = vmatprep.subr.mxu0 0.0
      %373 = vmatpush2.xpose.msra.mxu0 0.0
      %374 = vmatprep.subr.mxu0 0.0
      %375 = vmatpush2.xpose.msra.mxu0 0.0
      %376 = vmatprep.subr.mxu0 0.0
      %377 = vmatpush2.xpose.msra.mxu0 0.0
      %378 = vmatprep.subr.mxu0 0.0
      %379 = vmatpush2.xpose.msra.mxu0 0.0
      %380 = vmatprep.subr.mxu0 0.0
      %381 = vmatpush2.xpose.msra.mxu0 0.0
      %382 = vmatprep.subr.mxu0 0.0
      %383 = vmatpush2.xpose.msra.mxu0 0.0
      %384 = vmatprep.subr.mxu0 0.0
      %385 = vmatpush2.xpose.msra.mxu0 0.0
      %386 = vmatprep.mubr.f32.mxu0 0.0
      %387 = vmatmul.mubr.f32.gmra.mxu0 %v296
      %v388 = vpop.f32.mrf.mxu0
      %v389 = vadd.f32 0.0, %v388
      %v390 = vpop.f32.mrf.mxu0
      %391 = vdwg.mxu0
      %392 = vmatprep.subr.mxu0 0.0
      %393 = vmatpush1.msra.mxu0 0.0
      %394 = vmatprep.subr.mxu0 0.0
      %395 = vmatpush1.msra.mxu0 0.0
      %396 = vmatprep.subr.mxu0 0.0
      %397 = vmatpush1.msra.mxu0 0.0
      %398 = vmatprep.subr.mxu0 0.0
      %399 = vmatpush1.msra.mxu0 0.0
      %400 = vmatprep.subr.mxu0 0.0
      %401 = vmatpush1.msra.mxu0 0.0
      %402 = vmatprep.subr.mxu0 0.0
      %403 = vmatpush1.msra.mxu0 0.0
      %404 = vmatprep.subr.mxu0 0.0
      %405 = vmatpush1.msra.mxu0 0.0
      %406 = vmatprep.subr.mxu0 0.0
      %407 = vmatpush1.msra.mxu0 0.0
      %408 = vmatprep.subr.mxu0 0.0
      %409 = vmatpush1.msra.mxu0 0.0
      %410 = vmatprep.subr.mxu0 0.0
      %411 = vmatpush1.msra.mxu0 0.0
      %412 = vmatprep.subr.mxu0 0.0
      %413 = vmatpush1.msra.mxu0 0.0
      %414 = vmatprep.subr.mxu0 0.0
      %415 = vmatpush1.msra.mxu0 0.0
      %416 = vmatprep.subr.mxu0 0.0
      %417 = vmatpush1.msra.mxu0 0.0
      %418 = vmatprep.subr.mxu0 0.0
      %419 = vmatpush1.msra.mxu0 0.0
      %420 = vmatprep.subr.mxu0 0.0
      %421 = vmatpush1.msra.mxu0 0.0
      %422 = vmatprep.subr.mxu0 0.0
      %423 = vmatpush1.msra.mxu0 %v278
      %424 = vmatprep.subr.mxu0 0.0
      %425 = vmatpush2.msra.mxu0 0.0
      %426 = vmatprep.subr.mxu0 0.0
      %427 = vmatpush2.msra.mxu0 0.0
      %428 = vmatprep.subr.mxu0 0.0
      %429 = vmatpush2.msra.mxu0 0.0
      %430 = vmatprep.subr.mxu0 0.0
      %431 = vmatpush2.msra.mxu0 0.0
      %432 = vmatprep.subr.mxu0 0.0
      %433 = vmatpush2.msra.mxu0 0.0
      %434 = vmatprep.subr.mxu0 0.0
      %435 = vmatpush2.msra.mxu0 0.0
      %436 = vmatprep.subr.mxu0 0.0
      %437 = vmatpush2.msra.mxu0 0.0
      %438 = vmatprep.subr.mxu0 0.0
      %439 = vmatpush2.msra.mxu0 0.0
      %440 = vmatprep.subr.mxu0 0.0
      %441 = vmatpush2.msra.mxu0 0.0
      %442 = vmatprep.subr.mxu0 0.0
      %443 = vmatpush2.msra.mxu0 0.0
      %444 = vmatprep.subr.mxu0 0.0
      %445 = vmatpush2.msra.mxu0 0.0
      %446 = vmatprep.subr.mxu0 0.0
      %447 = vmatpush2.msra.mxu0 0.0
      %448 = vmatprep.subr.mxu0 0.0
      %449 = vmatpush2.msra.mxu0 0.0
      %450 = vmatprep.subr.mxu0 0.0
      %451 = vmatpush2.msra.mxu0 0.0
      %452 = vmatprep.subr.mxu0 0.0
      %453 = vmatpush2.msra.mxu0 0.0
      %454 = vmatprep.subr.mxu0 0.0
      %455 = vmatpush2.msra.mxu0 0.0
      %456 = vmatprep.mubr.f32.mxu0 0.0
      %457 = vmatmul.mubr.f32.gmra.mxu0 %v299
      %v458 = vpop.f32.mrf.mxu0
      %v459 = vadd.f32 0.0, %v458
      %v460 = vpop.f32.mrf.mxu0
      %461 = vmatprep.mubr.f32.mxu0 0.0
      %462 = vmatmul.mubr.f32.gmra.mxu0 %v302
      %v463 = vpop.f32.mrf.mxu0
      %v464 = vadd.f32 0.0, %v463
      %v465 = vpop.f32.mrf.mxu0
      %466 = vmatprep.mubr.f32.mxu0 0.0
      %467 = vmatmul.mubr.f32.gmra.mxu0 %v305
      %v468 = vpop.f32.mrf.mxu0
      %v469 = vadd.f32 0.0, %v468
      %v470 = vpop.f32.mrf.mxu0
      %471 = vmatprep.mubr.f32.mxu0 0.0
      %472 = vmatmul.mubr.f32.gmra.mxu0 %v308
      %v473 = vpop.f32.mrf.mxu0
      %v474 = vadd.f32 0.0, %v473
      %v475 = vpop.f32.mrf.mxu0
      %476 = vmatprep.mubr.f32.mxu0 0.0
      %477 = vmatmul.mubr.f32.gmra.mxu0 %v311
      %v478 = vpop.f32.mrf.mxu0
      %v479 = vadd.f32 0.0, %v478
      %v480 = vpop.f32.mrf.mxu0
      %481 = vmatprep.mubr.f32.mxu0 0.0
      %482 = vmatmul.mubr.f32.gmra.mxu0 %v314
      %v483 = vpop.f32.mrf.mxu0
      %v484 = vadd.f32 0.0, %v483
      %v485 = vpop.f32.mrf.mxu0
      %486 = vmatprep.mubr.f32.mxu0 0.0
      %487 = vmatmul.mubr.f32.gmra.mxu0 %v317
      %v488 = vpop.f32.mrf.mxu0
      %v489 = vadd.f32 0.0, %v488
      %v490 = vpop.f32.mrf.mxu0
      %491 = vmatprep.mubr.f32.mxu0 0.0
      %492 = vmatmul.mubr.f32.gmra.mxu0 %v320
      %v493 = vpop.f32.mrf.mxu0
      %v494 = vadd.f32 0.0, %v493
      %v495 = vpop.f32.mrf.mxu0
      %496 = vdwg.mxu0
      %v497 = vlaneseq
      %v498 = vshrl.u32 %v497, 7
      %v499 = vsub.s32 0, %v498
      %v500 = vrot.slane %v389, %v499
      %v502 = vsel %vm294, %v459, 0
      %v505 = vsel %vm294, %v464, 0
      %v508 = vsel %vm294, %v469, 0
      %v511 = vsel %vm294, %v474, 0
      %v514 = vsel %vm294, %v479, 0
      %v517 = vsel %vm294, %v484, 0
      %v520 = vsel %vm294, %v489, 0
      %v523 = vsel %vm294, %v494, 0
      %525 = vmatprep.subr.mxu0 0.0
      %526 = vmatpush1.xpose.msra.mxu0 0.0
      %527 = vmatprep.subr.mxu0 0.0
      %528 = vmatpush1.xpose.msra.mxu0 0.0
      %529 = vmatprep.subr.mxu0 0.0
      %530 = vmatpush1.xpose.msra.mxu0 0.0
      %531 = vmatprep.subr.mxu0 0.0
      %532 = vmatpush1.xpose.msra.mxu0 0.0
      %533 = vmatprep.subr.mxu0 0.0
      %534 = vmatpush1.xpose.msra.mxu0 0.0
      %535 = vmatprep.subr.mxu0 0.0
      %536 = vmatpush1.xpose.msra.mxu0 0.0
      %537 = vmatprep.subr.mxu0 0.0
      %538 = vmatpush1.xpose.msra.mxu0 0.0
      %539 = vmatprep.subr.mxu0 0.0
      %540 = vmatpush1.xpose.msra.mxu0 0.0
      %541 = vmatprep.subr.mxu0 0.0
      %542 = vmatpush1.xpose.msra.mxu0 %v320
      %543 = vmatprep.subr.mxu0 0.0
      %544 = vmatpush1.xpose.msra.mxu0 %v317
      %545 = vmatprep.subr.mxu0 0.0
      %546 = vmatpush1.xpose.msra.mxu0 %v314
      %547 = vmatprep.subr.mxu0 0.0
      %548 = vmatpush1.xpose.msra.mxu0 %v311
      %549 = vmatprep.subr.mxu0 0.0
      %550 = vmatpush1.xpose.msra.mxu0 %v308
      %551 = vmatprep.subr.mxu0 0.0
      %552 = vmatpush1.xpose.msra.mxu0 %v305
      %553 = vmatprep.subr.mxu0 0.0
      %554 = vmatpush1.xpose.msra.mxu0 %v302
      %555 = vmatprep.subr.mxu0 0.0
      %556 = vmatpush1.xpose.msra.mxu0 %v299
      %557 = vmatprep.subr.mxu0 0.0
      %558 = vmatpush2.xpose.msra.mxu0 0.0
      %559 = vmatprep.subr.mxu0 0.0
      %560 = vmatpush2.xpose.msra.mxu0 0.0
      %561 = vmatprep.subr.mxu0 0.0
      %562 = vmatpush2.xpose.msra.mxu0 0.0
      %563 = vmatprep.subr.mxu0 0.0
      %564 = vmatpush2.xpose.msra.mxu0 0.0
      %565 = vmatprep.subr.mxu0 0.0
      %566 = vmatpush2.xpose.msra.mxu0 0.0
      %567 = vmatprep.subr.mxu0 0.0
      %568 = vmatpush2.xpose.msra.mxu0 0.0
      %569 = vmatprep.subr.mxu0 0.0
      %570 = vmatpush2.xpose.msra.mxu0 0.0
      %571 = vmatprep.subr.mxu0 0.0
      %572 = vmatpush2.xpose.msra.mxu0 0.0
      %573 = vmatprep.subr.mxu0 0.0
      %574 = vmatpush2.xpose.msra.mxu0 0.0
      %575 = vmatprep.subr.mxu0 0.0
      %576 = vmatpush2.xpose.msra.mxu0 0.0
      %577 = vmatprep.subr.mxu0 0.0
      %578 = vmatpush2.xpose.msra.mxu0 0.0
      %579 = vmatprep.subr.mxu0 0.0
      %580 = vmatpush2.xpose.msra.mxu0 0.0
      %581 = vmatprep.subr.mxu0 0.0
      %582 = vmatpush2.xpose.msra.mxu0 0.0
      %583 = vmatprep.subr.mxu0 0.0
      %584 = vmatpush2.xpose.msra.mxu0 0.0
      %585 = vmatprep.subr.mxu0 0.0
      %586 = vmatpush2.xpose.msra.mxu0 0.0
      %587 = vmatprep.subr.mxu0 0.0
      %588 = vmatpush2.xpose.msra.mxu0 0.0
      %589 = vmatprep.mubr.f32.mxu0 0.0
      %590 = vmatmul.mubr.f32.gmra.mxu0 %v502
      %v591 = vpop.f32.mrf.mxu0
      %v592 = vadd.f32 %v500, %v591
      %v593 = vpop.f32.mrf.mxu0
      %594 = vmatprep.mubr.f32.mxu0 0.0
      %595 = vmatmul.mubr.f32.gmra.mxu0 %v505
      %v596 = vpop.f32.mrf.mxu0
      %v597 = vadd.f32 %v500, %v596
      %v598 = vpop.f32.mrf.mxu0
      %599 = vmatprep.mubr.f32.mxu0 0.0
      %600 = vmatmul.mubr.f32.gmra.mxu0 %v508
      %v601 = vpop.f32.mrf.mxu0
      %v602 = vadd.f32 %v500, %v601
      %v603 = vpop.f32.mrf.mxu0
      %604 = vmatprep.mubr.f32.mxu0 0.0
      %605 = vmatmul.mubr.f32.gmra.mxu0 %v511
      %v606 = vpop.f32.mrf.mxu0
      %v607 = vadd.f32 %v500, %v606
      %v608 = vpop.f32.mrf.mxu0
      %609 = vmatprep.mubr.f32.mxu0 0.0
      %610 = vmatmul.mubr.f32.gmra.mxu0 %v514
      %v611 = vpop.f32.mrf.mxu0
      %v612 = vadd.f32 %v500, %v611
      %v613 = vpop.f32.mrf.mxu0
      %614 = vmatprep.mubr.f32.mxu0 0.0
      %615 = vmatmul.mubr.f32.gmra.mxu0 %v517
      %v616 = vpop.f32.mrf.mxu0
      %v617 = vadd.f32 %v500, %v616
      %v618 = vpop.f32.mrf.mxu0
      %619 = vmatprep.mubr.f32.mxu0 0.0
      %620 = vmatmul.mubr.f32.gmra.mxu0 %v520
      %v621 = vpop.f32.mrf.mxu0
      %v622 = vadd.f32 %v500, %v621
      %v623 = vpop.f32.mrf.mxu0
      %624 = vmatprep.mubr.f32.mxu0 0.0
      %625 = vmatmul.mubr.f32.gmra.mxu0 %v523
      %v626 = vpop.f32.mrf.mxu0
      %v627 = vadd.f32 %v500, %v626
      %v628 = vpop.f32.mrf.mxu0
      %629 = vdwg.mxu0
      %vm630 = vcmask 523264
      %v631 = vsel %vm630, %v592, -inf
      %632 = vmax.xlane.f32.xlu0 %v631
      %v633 = vpop.xlane.xlu0 %632
      %v634 = vsel %vm630, %v597, -inf
      %635 = vmax.xlane.f32.xlu0 %v634
      %v636 = vpop.xlane.xlu0 %635
      %v637 = vsel %vm630, %v602, -inf
      %638 = vmax.xlane.f32.xlu0 %v637
      %v639 = vpop.xlane.xlu0 %638
      %v640 = vsel %vm630, %v607, -inf
      %641 = vmax.xlane.f32.xlu0 %v640
      %v642 = vpop.xlane.xlu0 %641
      %v643 = vsel %vm630, %v612, -inf
      %644 = vmax.xlane.f32.xlu0 %v643
      %v645 = vpop.xlane.xlu0 %644
      %v646 = vsel %vm630, %v617, -inf
      %647 = vmax.xlane.f32.xlu0 %v646
      %v648 = vpop.xlane.xlu0 %647
      %v649 = vsel %vm630, %v622, -inf
      %650 = vmax.xlane.f32.xlu0 %v649
      %v651 = vpop.xlane.xlu0 %650
      %v652 = vsel %vm630, %v627, -inf
      %653 = vmax.xlane.f32.xlu0 %v652
      %v654 = vpop.xlane.xlu0 %653
      %v655 = vsub.f32 %v592, %v633
      %v656 = vsub.f32 %v597, %v636
      %v657 = vsub.f32 %v602, %v639
      %v658 = vsub.f32 %v607, %v642
      %v659 = vsub.f32 %v612, %v645
      %v660 = vsub.f32 %v617, %v648
      %v661 = vsub.f32 %v622, %v651
      %v662 = vsub.f32 %v627, %v654
      %v663 = vmul.f32 %v655, 1.442695
      %v664 = vpow.pop %v663
      %v665 = vmul.f32 %v656, 1.442695
      %v666 = vpow.pop %v665
      %v667 = vmul.f32 %v657, 1.442695
      %v668 = vpow.pop %v667
      %v669 = vmul.f32 %v658, 1.442695
      %v670 = vpow.pop %v669
      %v671 = vmul.f32 %v659, 1.442695
      %v672 = vpow.pop %v671
      %v673 = vmul.f32 %v660, 1.442695
      %v674 = vpow.pop %v673
      %v675 = vmul.f32 %v661, 1.442695
      %v676 = vpow.pop %v675
      %v677 = vmul.f32 %v662, 1.442695
      %v678 = vpow.pop %v677
      %v679 = vsel %vm630, %v664, 0.0
      %680 = vadd.xlane.f32.xlu0 %v679
      %v681 = vpop.xlane.xlu0 %680
      %v682 = vsel %vm630, %v666, 0.0
      %683 = vadd.xlane.f32.xlu0 %v682
      %v684 = vpop.xlane.xlu0 %683
      %v685 = vsel %vm630, %v668, 0.0
      %686 = vadd.xlane.f32.xlu0 %v685
      %v687 = vpop.xlane.xlu0 %686
      %v688 = vsel %vm630, %v670, 0.0
      %689 = vadd.xlane.f32.xlu0 %v688
      %v690 = vpop.xlane.xlu0 %689
      %v691 = vsel %vm630, %v672, 0.0
      %692 = vadd.xlane.f32.xlu0 %v691
      %v693 = vpop.xlane.xlu0 %692
      %v694 = vsel %vm630, %v674, 0.0
      %695 = vadd.xlane.f32.xlu0 %v694
      %v696 = vpop.xlane.xlu0 %695
      %v697 = vsel %vm630, %v676, 0.0
      %698 = vadd.xlane.f32.xlu0 %v697
      %v699 = vpop.xlane.xlu0 %698
      %v700 = vsel %vm630, %v678, 0.0
      %701 = vadd.xlane.f32.xlu0 %v700
      %v702 = vpop.xlane.xlu0 %701
      %v703 = vrcp.pop %v681
      %v704 = vrcp.pop %v684
      %v705 = vrcp.pop %v687
      %v706 = vrcp.pop %v690
      %v707 = vrcp.pop %v693
      %v708 = vrcp.pop %v696
      %v709 = vrcp.pop %v699
      %v710 = vrcp.pop %v702
      %v711 = vmul.f32 %v664, %v703
      %v712 = vmul.f32 %v666, %v704
      %v713 = vmul.f32 %v668, %v705
      %v714 = vmul.f32 %v670, %v706
      %v715 = vmul.f32 %v672, %v707
      %v716 = vmul.f32 %v674, %v708
      %v717 = vmul.f32 %v676, %v709
      %v718 = vmul.f32 %v678, %v710
      %719 = vmatprep.subr.mxu0 0.0
      %720 = vmatpush1.msra.mxu0 0.0
      %721 = vmatprep.subr.mxu0 0.0
      %722 = vmatpush1.msra.mxu0 0.0
      %723 = vmatprep.subr.mxu0 0.0
      %724 = vmatpush1.msra.mxu0 0.0
      %725 = vmatprep.subr.mxu0 0.0
      %726 = vmatpush1.msra.mxu0 0.0
      %727 = vmatprep.subr.mxu0 0.0
      %728 = vmatpush1.msra.mxu0 0.0
      %729 = vmatprep.subr.mxu0 0.0
      %730 = vmatpush1.msra.mxu0 0.0
      %731 = vmatprep.subr.mxu0 0.0
      %732 = vmatpush1.msra.mxu0 0.0
      %733 = vmatprep.subr.mxu0 0.0
      %734 = vmatpush1.msra.mxu0 0.0
      %735 = vmatprep.subr.mxu0 0.0
      %736 = vmatpush1.msra.mxu0 0.0
      %737 = vmatprep.subr.mxu0 0.0
      %738 = vmatpush1.msra.mxu0 0.0
      %739 = vmatprep.subr.mxu0 0.0
      %740 = vmatpush1.msra.mxu0 0.0
      %741 = vmatprep.subr.mxu0 0.0
      %742 = vmatpush1.msra.mxu0 0.0
      %743 = vmatprep.subr.mxu0 0.0
      %744 = vmatpush1.msra.mxu0 0.0
      %745 = vmatprep.subr.mxu0 0.0
      %746 = vmatpush1.msra.mxu0 0.0
      %747 = vmatprep.subr.mxu0 0.0
      %748 = vmatpush1.msra.mxu0 0.0
      %749 = vmatprep.subr.mxu0 0.0
      %750 = vmatpush1.msra.mxu0 %v280
      %751 = vmatprep.subr.mxu0 0.0
      %752 = vmatpush2.msra.mxu0 0.0
      %753 = vmatprep.subr.mxu0 0.0
      %754 = vmatpush2.msra.mxu0 0.0
      %755 = vmatprep.subr.mxu0 0.0
      %756 = vmatpush2.msra.mxu0 0.0
      %757 = vmatprep.subr.mxu0 0.0
      %758 = vmatpush2.msra.mxu0 0.0
      %759 = vmatprep.subr.mxu0 0.0
      %760 = vmatpush2.msra.mxu0 0.0
      %761 = vmatprep.subr.mxu0 0.0
      %762 = vmatpush2.msra.mxu0 0.0
      %763 = vmatprep.subr.mxu0 0.0
      %764 = vmatpush2.msra.mxu0 0.0
      %765 = vmatprep.subr.mxu0 0.0
      %766 = vmatpush2.msra.mxu0 0.0
      %767 = vmatprep.subr.mxu0 0.0
      %768 = vmatpush2.msra.mxu0 0.0
      %769 = vmatprep.subr.mxu0 0.0
      %770 = vmatpush2.msra.mxu0 0.0
      %771 = vmatprep.subr.mxu0 0.0
      %772 = vmatpush2.msra.mxu0 0.0
      %773 = vmatprep.subr.mxu0 0.0
      %774 = vmatpush2.msra.mxu0 0.0
      %775 = vmatprep.subr.mxu0 0.0
      %776 = vmatpush2.msra.mxu0 0.0
      %777 = vmatprep.subr.mxu0 0.0
      %778 = vmatpush2.msra.mxu0 0.0
      %779 = vmatprep.subr.mxu0 0.0
      %780 = vmatpush2.msra.mxu0 0.0
      %781 = vmatprep.subr.mxu0 0.0
      %782 = vmatpush2.msra.mxu0 0.0
      %783 = vmatprep.mubr.f32.mxu0 0.0
      %784 = vmatmul.mubr.f32.gmra.mxu0 %v299
      %v785 = vpop.f32.mrf.mxu0
      %v786 = vadd.f32 0.0, %v785
      %v787 = vpop.f32.mrf.mxu0
      %788 = vmatprep.mubr.f32.mxu0 0.0
      %789 = vmatmul.mubr.f32.gmra.mxu0 %v302
      %v790 = vpop.f32.mrf.mxu0
      %v791 = vadd.f32 0.0, %v790
      %v792 = vpop.f32.mrf.mxu0
      %793 = vmatprep.mubr.f32.mxu0 0.0
      %794 = vmatmul.mubr.f32.gmra.mxu0 %v305
      %v795 = vpop.f32.mrf.mxu0
      %v796 = vadd.f32 0.0, %v795
      %v797 = vpop.f32.mrf.mxu0
      %798 = vmatprep.mubr.f32.mxu0 0.0
      %799 = vmatmul.mubr.f32.gmra.mxu0 %v308
      %v800 = vpop.f32.mrf.mxu0
      %v801 = vadd.f32 0.0, %v800
      %v802 = vpop.f32.mrf.mxu0
      %803 = vmatprep.mubr.f32.mxu0 0.0
      %804 = vmatmul.mubr.f32.gmra.mxu0 %v311
      %v805 = vpop.f32.mrf.mxu0
      %v806 = vadd.f32 0.0, %v805
      %v807 = vpop.f32.mrf.mxu0
      %808 = vmatprep.mubr.f32.mxu0 0.0
      %809 = vmatmul.mubr.f32.gmra.mxu0 %v314
      %v810 = vpop.f32.mrf.mxu0
      %v811 = vadd.f32 0.0, %v810
      %v812 = vpop.f32.mrf.mxu0
      %813 = vmatprep.mubr.f32.mxu0 0.0
      %814 = vmatmul.mubr.f32.gmra.mxu0 %v317
      %v815 = vpop.f32.mrf.mxu0
      %v816 = vadd.f32 0.0, %v815
      %v817 = vpop.f32.mrf.mxu0
      %818 = vmatprep.mubr.f32.mxu0 0.0
      %819 = vmatmul.mubr.f32.gmra.mxu0 %v320
      %v820 = vpop.f32.mrf.mxu0
      %v821 = vadd.f32 0.0, %v820
      %v822 = vpop.f32.mrf.mxu0
      %823 = vdwg.mxu0
      %824 = vmatprep.subr.mxu0 0.0
      %825 = vmatpush1.msra.mxu0 0.0
      %826 = vmatprep.subr.mxu0 0.0
      %827 = vmatpush1.msra.mxu0 0.0
      %828 = vmatprep.subr.mxu0 0.0
      %829 = vmatpush1.msra.mxu0 0.0
      %830 = vmatprep.subr.mxu0 0.0
      %831 = vmatpush1.msra.mxu0 0.0
      %832 = vmatprep.subr.mxu0 0.0
      %833 = vmatpush1.msra.mxu0 0.0
      %834 = vmatprep.subr.mxu0 0.0
      %835 = vmatpush1.msra.mxu0 0.0
      %836 = vmatprep.subr.mxu0 0.0
      %837 = vmatpush1.msra.mxu0 0.0
      %838 = vmatprep.subr.mxu0 0.0
      %839 = vmatpush1.msra.mxu0 0.0
      %840 = vmatprep.subr.mxu0 0.0
      %841 = vmatpush1.msra.mxu0 0.0
      %842 = vmatprep.subr.mxu0 0.0
      %843 = vmatpush1.msra.mxu0 0.0
      %844 = vmatprep.subr.mxu0 0.0
      %845 = vmatpush1.msra.mxu0 0.0
      %846 = vmatprep.subr.mxu0 0.0
      %847 = vmatpush1.msra.mxu0 0.0
      %848 = vmatprep.subr.mxu0 0.0
      %849 = vmatpush1.msra.mxu0 0.0
      %850 = vmatprep.subr.mxu0 0.0
      %851 = vmatpush1.msra.mxu0 0.0
      %852 = vmatprep.subr.mxu0 0.0
      %853 = vmatpush1.msra.mxu0 0.0
      %854 = vmatprep.subr.mxu0 0.0
      %855 = vmatpush1.msra.mxu0 %v279
      %856 = vmatprep.subr.mxu0 0.0
      %857 = vmatpush2.msra.mxu0 0.0
      %858 = vmatprep.subr.mxu0 0.0
      %859 = vmatpush2.msra.mxu0 0.0
      %860 = vmatprep.subr.mxu0 0.0
      %861 = vmatpush2.msra.mxu0 0.0
      %862 = vmatprep.subr.mxu0 0.0
      %863 = vmatpush2.msra.mxu0 0.0
      %864 = vmatprep.subr.mxu0 0.0
      %865 = vmatpush2.msra.mxu0 0.0
      %866 = vmatprep.subr.mxu0 0.0
      %867 = vmatpush2.msra.mxu0 0.0
      %868 = vmatprep.subr.mxu0 0.0
      %869 = vmatpush2.msra.mxu0 0.0
      %870 = vmatprep.subr.mxu0 0.0
      %871 = vmatpush2.msra.mxu0 0.0
      %872 = vmatprep.subr.mxu0 0.0
      %873 = vmatpush2.msra.mxu0 0.0
      %874 = vmatprep.subr.mxu0 0.0
      %875 = vmatpush2.msra.mxu0 0.0
      %876 = vmatprep.subr.mxu0 0.0
      %877 = vmatpush2.msra.mxu0 0.0
      %878 = vmatprep.subr.mxu0 0.0
      %879 = vmatpush2.msra.mxu0 0.0
      %880 = vmatprep.subr.mxu0 0.0
      %881 = vmatpush2.msra.mxu0 0.0
      %882 = vmatprep.subr.mxu0 0.0
      %883 = vmatpush2.msra.mxu0 0.0
      %884 = vmatprep.subr.mxu0 0.0
      %885 = vmatpush2.msra.mxu0 0.0
      %886 = vmatprep.subr.mxu0 0.0
      %887 = vmatpush2.msra.mxu0 0.0
      %888 = vmatprep.mubr.f32.mxu0 0.0
      %889 = vmatmul.mubr.f32.gmra.mxu0 %v299
      %v890 = vpop.f32.mrf.mxu0
      %v891 = vadd.f32 0.0, %v890
      %v892 = vpop.f32.mrf.mxu0
      %893 = vmatprep.mubr.f32.mxu0 0.0
      %894 = vmatmul.mubr.f32.gmra.mxu0 %v302
      %v895 = vpop.f32.mrf.mxu0
      %v896 = vadd.f32 0.0, %v895
      %v897 = vpop.f32.mrf.mxu0
      %898 = vmatprep.mubr.f32.mxu0 0.0
      %899 = vmatmul.mubr.f32.gmra.mxu0 %v305
      %v900 = vpop.f32.mrf.mxu0
      %v901 = vadd.f32 0.0, %v900
      %v902 = vpop.f32.mrf.mxu0
      %903 = vmatprep.mubr.f32.mxu0 0.0
      %904 = vmatmul.mubr.f32.gmra.mxu0 %v308
      %v905 = vpop.f32.mrf.mxu0
      %v906 = vadd.f32 0.0, %v905
      %v907 = vpop.f32.mrf.mxu0
      %908 = vmatprep.mubr.f32.mxu0 0.0
      %909 = vmatmul.mubr.f32.gmra.mxu0 %v311
      %v910 = vpop.f32.mrf.mxu0
      %v911 = vadd.f32 0.0, %v910
      %v912 = vpop.f32.mrf.mxu0
      %913 = vmatprep.mubr.f32.mxu0 0.0
      %914 = vmatmul.mubr.f32.gmra.mxu0 %v314
      %v915 = vpop.f32.mrf.mxu0
      %v916 = vadd.f32 0.0, %v915
      %v917 = vpop.f32.mrf.mxu0
      %918 = vmatprep.mubr.f32.mxu0 0.0
      %919 = vmatmul.mubr.f32.gmra.mxu0 %v317
      %v920 = vpop.f32.mrf.mxu0
      %v921 = vadd.f32 0.0, %v920
      %v922 = vpop.f32.mrf.mxu0
      %923 = vmatprep.mubr.f32.mxu0 0.0
      %924 = vmatmul.mubr.f32.gmra.mxu0 %v320
      %v925 = vpop.f32.mrf.mxu0
      %v926 = vadd.f32 0.0, %v925
      %v927 = vpop.f32.mrf.mxu0
      %928 = vdwg.mxu0
      %v929 = vlaneseq
      %v930 = vshrl.u32 %v929, 7
      %v931 = vsub.s32 1, %v930
      %v932 = vrot.slane %v389, %v931
      %v934 = vsel %vm294, %v891, 0
      %v937 = vsel %vm294, %v896, 0
      %v940 = vsel %vm294, %v901, 0
      %v943 = vsel %vm294, %v906, 0
      %v946 = vsel %vm294, %v911, 0
      %v949 = vsel %vm294, %v916, 0
      %v952 = vsel %vm294, %v921, 0
      %v955 = vsel %vm294, %v926, 0
      %957 = vmatprep.subr.mxu0 0.0
      %958 = vmatpush1.xpose.msra.mxu0 0.0
      %959 = vmatprep.subr.mxu0 0.0
      %960 = vmatpush1.xpose.msra.mxu0 0.0
      %961 = vmatprep.subr.mxu0 0.0
      %962 = vmatpush1.xpose.msra.mxu0 0.0
      %963 = vmatprep.subr.mxu0 0.0
      %964 = vmatpush1.xpose.msra.mxu0 0.0
      %965 = vmatprep.subr.mxu0 0.0
      %966 = vmatpush1.xpose.msra.mxu0 0.0
      %967 = vmatprep.subr.mxu0 0.0
      %968 = vmatpush1.xpose.msra.mxu0 0.0
      %969 = vmatprep.subr.mxu0 0.0
      %970 = vmatpush1.xpose.msra.mxu0 0.0
      %971 = vmatprep.subr.mxu0 0.0
      %972 = vmatpush1.xpose.msra.mxu0 0.0
      %973 = vmatprep.subr.mxu0 0.0
      %974 = vmatpush1.xpose.msra.mxu0 %v320
      %975 = vmatprep.subr.mxu0 0.0
      %976 = vmatpush1.xpose.msra.mxu0 %v317
      %977 = vmatprep.subr.mxu0 0.0
      %978 = vmatpush1.xpose.msra.mxu0 %v314
      %979 = vmatprep.subr.mxu0 0.0
      %980 = vmatpush1.xpose.msra.mxu0 %v311
      %981 = vmatprep.subr.mxu0 0.0
      %982 = vmatpush1.xpose.msra.mxu0 %v308
      %983 = vmatprep.subr.mxu0 0.0
      %984 = vmatpush1.xpose.msra.mxu0 %v305
      %985 = vmatprep.subr.mxu0 0.0
      %986 = vmatpush1.xpose.msra.mxu0 %v302
      %987 = vmatprep.subr.mxu0 0.0
      %988 = vmatpush1.xpose.msra.mxu0 %v299
      %989 = vmatprep.subr.mxu0 0.0
      %990 = vmatpush2.xpose.msra.mxu0 0.0
      %991 = vmatprep.subr.mxu0 0.0
      %992 = vmatpush2.xpose.msra.mxu0 0.0
      %993 = vmatprep.subr.mxu0 0.0
      %994 = vmatpush2.xpose.msra.mxu0 0.0
      %995 = vmatprep.subr.mxu0 0.0
      %996 = vmatpush2.xpose.msra.mxu0 0.0
      %997 = vmatprep.subr.mxu0 0.0
      %998 = vmatpush2.xpose.msra.mxu0 0.0
      %999 = vmatprep.subr.mxu0 0.0
      %1000 = vmatpush2.xpose.msra.mxu0 0.0
      %1001 = vmatprep.subr.mxu0 0.0
      %1002 = vmatpush2.xpose.msra.mxu0 0.0
      %1003 = vmatprep.subr.mxu0 0.0
      %1004 = vmatpush2.xpose.msra.mxu0 0.0
      %1005 = vmatprep.subr.mxu0 0.0
      %1006 = vmatpush2.xpose.msra.mxu0 0.0
      %1007 = vmatprep.subr.mxu0 0.0
      %1008 = vmatpush2.xpose.msra.mxu0 0.0
      %1009 = vmatprep.subr.mxu0 0.0
      %1010 = vmatpush2.xpose.msra.mxu0 0.0
      %1011 = vmatprep.subr.mxu0 0.0
      %1012 = vmatpush2.xpose.msra.mxu0 0.0
      %1013 = vmatprep.subr.mxu0 0.0
      %1014 = vmatpush2.xpose.msra.mxu0 0.0
      %1015 = vmatprep.subr.mxu0 0.0
      %1016 = vmatpush2.xpose.msra.mxu0 0.0
      %1017 = vmatprep.subr.mxu0 0.0
      %1018 = vmatpush2.xpose.msra.mxu0 0.0
      %1019 = vmatprep.subr.mxu0 0.0
      %1020 = vmatpush2.xpose.msra.mxu0 0.0
      %1021 = vmatprep.mubr.f32.mxu0 0.0
      %1022 = vmatmul.mubr.f32.gmra.mxu0 %v934
      %v1023 = vpop.f32.mrf.mxu0
      %v1024 = vadd.f32 %v932, %v1023
      %v1025 = vpop.f32.mrf.mxu0
      %1026 = vmatprep.mubr.f32.mxu0 0.0
      %1027 = vmatmul.mubr.f32.gmra.mxu0 %v937
      %v1028 = vpop.f32.mrf.mxu0
      %v1029 = vadd.f32 %v932, %v1028
      %v1030 = vpop.f32.mrf.mxu0
      %1031 = vmatprep.mubr.f32.mxu0 0.0
      %1032 = vmatmul.mubr.f32.gmra.mxu0 %v940
      %v1033 = vpop.f32.mrf.mxu0
      %v1034 = vadd.f32 %v932, %v1033
      %v1035 = vpop.f32.mrf.mxu0
      %1036 = vmatprep.mubr.f32.mxu0 0.0
      %1037 = vmatmul.mubr.f32.gmra.mxu0 %v943
      %v1038 = vpop.f32.mrf.mxu0
      %v1039 = vadd.f32 %v932, %v1038
      %v1040 = vpop.f32.mrf.mxu0
      %1041 = vmatprep.mubr.f32.mxu0 0.0
      %1042 = vmatmul.mubr.f32.gmra.mxu0 %v946
      %v1043 = vpop.f32.mrf.mxu0
      %v1044 = vadd.f32 %v932, %v1043
      %v1045 = vpop.f32.mrf.mxu0
      %1046 = vmatprep.mubr.f32.mxu0 0.0
      %1047 = vmatmul.mubr.f32.gmra.mxu0 %v949
      %v1048 = vpop.f32.mrf.mxu0
      %v1049 = vadd.f32 %v932, %v1048
      %v1050 = vpop.f32.mrf.mxu0
      %1051 = vmatprep.mubr.f32.mxu0 0.0
      %1052 = vmatmul.mubr.f32.gmra.mxu0 %v952
      %v1053 = vpop.f32.mrf.mxu0
      %v1054 = vadd.f32 %v932, %v1053
      %v1055 = vpop.f32.mrf.mxu0
      %1056 = vmatprep.mubr.f32.mxu0 0.0
      %1057 = vmatmul.mubr.f32.gmra.mxu0 %v955
      %v1058 = vpop.f32.mrf.mxu0
      %v1059 = vadd.f32 %v932, %v1058
      %v1060 = vpop.f32.mrf.mxu0
      %1061 = vdwg.mxu0
      %v1062 = vsel %vm630, %v1024, -inf
      %1063 = vmax.xlane.f32.xlu0 %v1062
      %v1064 = vpop.xlane.xlu0 %1063
      %v1065 = vsel %vm630, %v1029, -inf
      %1066 = vmax.xlane.f32.xlu0 %v1065
      %v1067 = vpop.xlane.xlu0 %1066
      %v1068 = vsel %vm630, %v1034, -inf
      %1069 = vmax.xlane.f32.xlu0 %v1068
      %v1070 = vpop.xlane.xlu0 %1069
      %v1071 = vsel %vm630, %v1039, -inf
      %1072 = vmax.xlane.f32.xlu0 %v1071
      %v1073 = vpop.xlane.xlu0 %1072
      %v1074 = vsel %vm630, %v1044, -inf
      %1075 = vmax.xlane.f32.xlu0 %v1074
      %v1076 = vpop.xlane.xlu0 %1075
      %v1077 = vsel %vm630, %v1049, -inf
      %1078 = vmax.xlane.f32.xlu0 %v1077
      %v1079 = vpop.xlane.xlu0 %1078
      %v1080 = vsel %vm630, %v1054, -inf
      %1081 = vmax.xlane.f32.xlu0 %v1080
      %v1082 = vpop.xlane.xlu0 %1081
      %v1083 = vsel %vm630, %v1059, -inf
      %1084 = vmax.xlane.f32.xlu0 %v1083
      %v1085 = vpop.xlane.xlu0 %1084
      %v1086 = vsub.f32 %v1024, %v1064
      %v1087 = vsub.f32 %v1029, %v1067
      %v1088 = vsub.f32 %v1034, %v1070
      %v1089 = vsub.f32 %v1039, %v1073
      %v1090 = vsub.f32 %v1044, %v1076
      %v1091 = vsub.f32 %v1049, %v1079
      %v1092 = vsub.f32 %v1054, %v1082
      %v1093 = vsub.f32 %v1059, %v1085
      %v1094 = vmul.f32 %v1086, 1.442695
      %v1095 = vpow.pop %v1094
      %v1096 = vmul.f32 %v1087, 1.442695
      %v1097 = vpow.pop %v1096
      %v1098 = vmul.f32 %v1088, 1.442695
      %v1099 = vpow.pop %v1098
      %v1100 = vmul.f32 %v1089, 1.442695
      %v1101 = vpow.pop %v1100
      %v1102 = vmul.f32 %v1090, 1.442695
      %v1103 = vpow.pop %v1102
      %v1104 = vmul.f32 %v1091, 1.442695
      %v1105 = vpow.pop %v1104
      %v1106 = vmul.f32 %v1092, 1.442695
      %v1107 = vpow.pop %v1106
      %v1108 = vmul.f32 %v1093, 1.442695
      %v1109 = vpow.pop %v1108
      %v1110 = vsel %vm630, %v1095, 0.0
      %1111 = vadd.xlane.f32.xlu0 %v1110
      %v1112 = vpop.xlane.xlu0 %1111
      %v1113 = vsel %vm630, %v1097, 0.0
      %1114 = vadd.xlane.f32.xlu0 %v1113
      %v1115 = vpop.xlane.xlu0 %1114
      %v1116 = vsel %vm630, %v1099, 0.0
      %1117 = vadd.xlane.f32.xlu0 %v1116
      %v1118 = vpop.xlane.xlu0 %1117
      %v1119 = vsel %vm630, %v1101, 0.0
      %1120 = vadd.xlane.f32.xlu0 %v1119
      %v1121 = vpop.xlane.xlu0 %1120
      %v1122 = vsel %vm630, %v1103, 0.0
      %1123 = vadd.xlane.f32.xlu0 %v1122
      %v1124 = vpop.xlane.xlu0 %1123
      %v1125 = vsel %vm630, %v1105, 0.0
      %1126 = vadd.xlane.f32.xlu0 %v1125
      %v1127 = vpop.xlane.xlu0 %1126
      %v1128 = vsel %vm630, %v1107, 0.0
      %1129 = vadd.xlane.f32.xlu0 %v1128
      %v1130 = vpop.xlane.xlu0 %1129
      %v1131 = vsel %vm630, %v1109, 0.0
      %1132 = vadd.xlane.f32.xlu0 %v1131
      %v1133 = vpop.xlane.xlu0 %1132
      %v1134 = vrcp.pop %v1112
      %v1135 = vrcp.pop %v1115
      %v1136 = vrcp.pop %v1118
      %v1137 = vrcp.pop %v1121
      %v1138 = vrcp.pop %v1124
      %v1139 = vrcp.pop %v1127
      %v1140 = vrcp.pop %v1130
      %v1141 = vrcp.pop %v1133
      %v1142 = vmul.f32 %v1095, %v1134
      %v1143 = vmul.f32 %v1097, %v1135
      %v1144 = vmul.f32 %v1099, %v1136
      %v1145 = vmul.f32 %v1101, %v1137
      %v1146 = vmul.f32 %v1103, %v1138
      %v1147 = vmul.f32 %v1105, %v1139
      %v1148 = vmul.f32 %v1107, %v1140
      %v1149 = vmul.f32 %v1109, %v1141
      %1150 = vmatprep.subr.mxu0 0.0
      %1151 = vmatpush1.msra.mxu0 0.0
      %1152 = vmatprep.subr.mxu0 0.0
      %1153 = vmatpush1.msra.mxu0 0.0
      %1154 = vmatprep.subr.mxu0 0.0
      %1155 = vmatpush1.msra.mxu0 0.0
      %1156 = vmatprep.subr.mxu0 0.0
      %1157 = vmatpush1.msra.mxu0 0.0
      %1158 = vmatprep.subr.mxu0 0.0
      %1159 = vmatpush1.msra.mxu0 0.0
      %1160 = vmatprep.subr.mxu0 0.0
      %1161 = vmatpush1.msra.mxu0 0.0
      %1162 = vmatprep.subr.mxu0 0.0
      %1163 = vmatpush1.msra.mxu0 0.0
      %1164 = vmatprep.subr.mxu0 0.0
      %1165 = vmatpush1.msra.mxu0 0.0
      %1166 = vmatprep.subr.mxu0 0.0
      %1167 = vmatpush1.msra.mxu0 0.0
      %1168 = vmatprep.subr.mxu0 0.0
      %1169 = vmatpush1.msra.mxu0 0.0
      %1170 = vmatprep.subr.mxu0 0.0
      %1171 = vmatpush1.msra.mxu0 0.0
      %1172 = vmatprep.subr.mxu0 0.0
      %1173 = vmatpush1.msra.mxu0 0.0
      %1174 = vmatprep.subr.mxu0 0.0
      %1175 = vmatpush1.msra.mxu0 0.0
      %1176 = vmatprep.subr.mxu0 0.0
      %1177 = vmatpush1.msra.mxu0 0.0
      %1178 = vmatprep.subr.mxu0 0.0
      %1179 = vmatpush1.msra.mxu0 0.0
      %1180 = vmatprep.subr.mxu0 0.0
      %1181 = vmatpush1.msra.mxu0 %v281
      %1182 = vmatprep.subr.mxu0 0.0
      %1183 = vmatpush2.msra.mxu0 0.0
      %1184 = vmatprep.subr.mxu0 0.0
      %1185 = vmatpush2.msra.mxu0 0.0
      %1186 = vmatprep.subr.mxu0 0.0
      %1187 = vmatpush2.msra.mxu0 0.0
      %1188 = vmatprep.subr.mxu0 0.0
      %1189 = vmatpush2.msra.mxu0 0.0
      %1190 = vmatprep.subr.mxu0 0.0
      %1191 = vmatpush2.msra.mxu0 0.0
      %1192 = vmatprep.subr.mxu0 0.0
      %1193 = vmatpush2.msra.mxu0 0.0
      %1194 = vmatprep.subr.mxu0 0.0
      %1195 = vmatpush2.msra.mxu0 0.0
      %1196 = vmatprep.subr.mxu0 0.0
      %1197 = vmatpush2.msra.mxu0 0.0
      %1198 = vmatprep.subr.mxu0 0.0
      %1199 = vmatpush2.msra.mxu0 0.0
      %1200 = vmatprep.subr.mxu0 0.0
      %1201 = vmatpush2.msra.mxu0 0.0
      %1202 = vmatprep.subr.mxu0 0.0
      %1203 = vmatpush2.msra.mxu0 0.0
      %1204 = vmatprep.subr.mxu0 0.0
      %1205 = vmatpush2.msra.mxu0 0.0
      %1206 = vmatprep.subr.mxu0 0.0
      %1207 = vmatpush2.msra.mxu0 0.0
      %1208 = vmatprep.subr.mxu0 0.0
      %1209 = vmatpush2.msra.mxu0 0.0
      %1210 = vmatprep.subr.mxu0 0.0
      %1211 = vmatpush2.msra.mxu0 0.0
      %1212 = vmatprep.subr.mxu0 0.0
      %1213 = vmatpush2.msra.mxu0 0.0
      %1214 = vmatprep.mubr.f32.mxu0 0.0
      %1215 = vmatmul.mubr.f32.gmra.mxu0 %v299
      %v1216 = vpop.f32.mrf.mxu0
      %v1217 = vadd.f32 0.0, %v1216
      %v1218 = vpop.f32.mrf.mxu0
      %1219 = vmatprep.mubr.f32.mxu0 0.0
      %1220 = vmatmul.mubr.f32.gmra.mxu0 %v302
      %v1221 = vpop.f32.mrf.mxu0
      %v1222 = vadd.f32 0.0, %v1221
      %v1223 = vpop.f32.mrf.mxu0
      %1224 = vmatprep.mubr.f32.mxu0 0.0
      %1225 = vmatmul.mubr.f32.gmra.mxu0 %v305
      %v1226 = vpop.f32.mrf.mxu0
      %v1227 = vadd.f32 0.0, %v1226
      %v1228 = vpop.f32.mrf.mxu0
      %1229 = vmatprep.mubr.f32.mxu0 0.0
      %1230 = vmatmul.mubr.f32.gmra.mxu0 %v308
      %v1231 = vpop.f32.mrf.mxu0
      %v1232 = vadd.f32 0.0, %v1231
      %v1233 = vpop.f32.mrf.mxu0
      %1234 = vmatprep.mubr.f32.mxu0 0.0
      %1235 = vmatmul.mubr.f32.gmra.mxu0 %v311
      %v1236 = vpop.f32.mrf.mxu0
      %v1237 = vadd.f32 0.0, %v1236
      %v1238 = vpop.f32.mrf.mxu0
      %1239 = vmatprep.mubr.f32.mxu0 0.0
      %1240 = vmatmul.mubr.f32.gmra.mxu0 %v314
      %v1241 = vpop.f32.mrf.mxu0
      %v1242 = vadd.f32 0.0, %v1241
      %v1243 = vpop.f32.mrf.mxu0
      %1244 = vmatprep.mubr.f32.mxu0 0.0
      %1245 = vmatmul.mubr.f32.gmra.mxu0 %v317
      %v1246 = vpop.f32.mrf.mxu0
      %v1247 = vadd.f32 0.0, %v1246
      %v1248 = vpop.f32.mrf.mxu0
      %1249 = vmatprep.mubr.f32.mxu0 0.0
      %1250 = vmatmul.mubr.f32.gmra.mxu0 %v320
      %v1251 = vpop.f32.mrf.mxu0
      %v1252 = vadd.f32 0.0, %v1251
      %v1253 = vpop.f32.mrf.mxu0
      %1254 = vdwg.mxu0
      %v1256 = vsel %vm630, %v1142, 0
      %v1259 = vsel %vm630, %v1143, 0
      %v1262 = vsel %vm630, %v1144, 0
      %v1265 = vsel %vm630, %v1145, 0
      %v1268 = vsel %vm630, %v1146, 0
      %v1271 = vsel %vm630, %v1147, 0
      %v1274 = vsel %vm630, %v1148, 0
      %v1277 = vsel %vm630, %v1149, 0
      %1279 = vmatprep.subr.mxu0 0.0
      %1280 = vmatpush1.msra.mxu0 0.0
      %1281 = vmatprep.subr.mxu0 0.0
      %1282 = vmatpush1.msra.mxu0 0.0
      %1283 = vmatprep.subr.mxu0 0.0
      %1284 = vmatpush1.msra.mxu0 0.0
      %1285 = vmatprep.subr.mxu0 0.0
      %1286 = vmatpush1.msra.mxu0 0.0
      %1287 = vmatprep.subr.mxu0 0.0
      %1288 = vmatpush1.msra.mxu0 0.0
      %1289 = vmatprep.subr.mxu0 0.0
      %1290 = vmatpush1.msra.mxu0 0.0
      %1291 = vmatprep.subr.mxu0 0.0
      %1292 = vmatpush1.msra.mxu0 0.0
      %1293 = vmatprep.subr.mxu0 0.0
      %1294 = vmatpush1.msra.mxu0 0.0
      %1295 = vmatprep.subr.mxu0 0.0
      %1296 = vmatpush1.msra.mxu0 %v1252
      %1297 = vmatprep.subr.mxu0 0.0
      %1298 = vmatpush1.msra.mxu0 %v1247
      %1299 = vmatprep.subr.mxu0 0.0
      %1300 = vmatpush1.msra.mxu0 %v1242
      %1301 = vmatprep.subr.mxu0 0.0
      %1302 = vmatpush1.msra.mxu0 %v1237
      %1303 = vmatprep.subr.mxu0 0.0
      %1304 = vmatpush1.msra.mxu0 %v1232
      %1305 = vmatprep.subr.mxu0 0.0
      %1306 = vmatpush1.msra.mxu0 %v1227
      %1307 = vmatprep.subr.mxu0 0.0
      %1308 = vmatpush1.msra.mxu0 %v1222
      %1309 = vmatprep.subr.mxu0 0.0
      %1310 = vmatpush1.msra.mxu0 %v1217
      %1311 = vmatprep.subr.mxu0 0.0
      %1312 = vmatpush2.msra.mxu0 0.0
      %1313 = vmatprep.subr.mxu0 0.0
      %1314 = vmatpush2.msra.mxu0 0.0
      %1315 = vmatprep.subr.mxu0 0.0
      %1316 = vmatpush2.msra.mxu0 0.0
      %1317 = vmatprep.subr.mxu0 0.0
      %1318 = vmatpush2.msra.mxu0 0.0
      %1319 = vmatprep.subr.mxu0 0.0
      %1320 = vmatpush2.msra.mxu0 0.0
      %1321 = vmatprep.subr.mxu0 0.0
      %1322 = vmatpush2.msra.mxu0 0.0
      %1323 = vmatprep.subr.mxu0 0.0
      %1324 = vmatpush2.msra.mxu0 0.0
      %1325 = vmatprep.subr.mxu0 0.0
      %1326 = vmatpush2.msra.mxu0 0.0
      %1327 = vmatprep.subr.mxu0 0.0
      %1328 = vmatpush2.msra.mxu0 0.0
      %1329 = vmatprep.subr.mxu0 0.0
      %1330 = vmatpush2.msra.mxu0 0.0
      %1331 = vmatprep.subr.mxu0 0.0
      %1332 = vmatpush2.msra.mxu0 0.0
      %1333 = vmatprep.subr.mxu0 0.0
      %1334 = vmatpush2.msra.mxu0 0.0
      %1335 = vmatprep.subr.mxu0 0.0
      %1336 = vmatpush2.msra.mxu0 0.0
      %1337 = vmatprep.subr.mxu0 0.0
      %1338 = vmatpush2.msra.mxu0 0.0
      %1339 = vmatprep.subr.mxu0 0.0
      %1340 = vmatpush2.msra.mxu0 0.0
      %1341 = vmatprep.subr.mxu0 0.0
      %1342 = vmatpush2.msra.mxu0 0.0
      %1343 = vmatprep.mubr.f32.mxu0 0.0
      %1344 = vmatmul.mubr.f32.gmra.mxu0 %v1256
      %v1345 = vpop.f32.mrf.mxu0
      %v1346 = vadd.f32 0.0, %v1345
      %v1347 = vpop.f32.mrf.mxu0
      %1348 = vmatprep.mubr.f32.mxu0 0.0
      %1349 = vmatmul.mubr.f32.gmra.mxu0 %v1259
      %v1350 = vpop.f32.mrf.mxu0
      %v1351 = vadd.f32 0.0, %v1350
      %v1352 = vpop.f32.mrf.mxu0
      %1353 = vmatprep.mubr.f32.mxu0 0.0
      %1354 = vmatmul.mubr.f32.gmra.mxu0 %v1262
      %v1355 = vpop.f32.mrf.mxu0
      %v1356 = vadd.f32 0.0, %v1355
      %v1357 = vpop.f32.mrf.mxu0
      %1358 = vmatprep.mubr.f32.mxu0 0.0
      %1359 = vmatmul.mubr.f32.gmra.mxu0 %v1265
      %v1360 = vpop.f32.mrf.mxu0
      %v1361 = vadd.f32 0.0, %v1360
      %v1362 = vpop.f32.mrf.mxu0
      %1363 = vmatprep.mubr.f32.mxu0 0.0
      %1364 = vmatmul.mubr.f32.gmra.mxu0 %v1268
      %v1365 = vpop.f32.mrf.mxu0
      %v1366 = vadd.f32 0.0, %v1365
      %v1367 = vpop.f32.mrf.mxu0
      %1368 = vmatprep.mubr.f32.mxu0 0.0
      %1369 = vmatmul.mubr.f32.gmra.mxu0 %v1271
      %v1370 = vpop.f32.mrf.mxu0
      %v1371 = vadd.f32 0.0, %v1370
      %v1372 = vpop.f32.mrf.mxu0
      %1373 = vmatprep.mubr.f32.mxu0 0.0
      %1374 = vmatmul.mubr.f32.gmra.mxu0 %v1274
      %v1375 = vpop.f32.mrf.mxu0
      %v1376 = vadd.f32 0.0, %v1375
      %v1377 = vpop.f32.mrf.mxu0
      %1378 = vmatprep.mubr.f32.mxu0 0.0
      %1379 = vmatmul.mubr.f32.gmra.mxu0 %v1277
      %v1380 = vpop.f32.mrf.mxu0
      %v1381 = vadd.f32 0.0, %v1380
      %v1382 = vpop.f32.mrf.mxu0
      %1383 = vdwg.mxu0
      %v1385 = vsel %vm630, %v711, 0
      %v1388 = vsel %vm630, %v712, 0
      %v1391 = vsel %vm630, %v713, 0
      %v1394 = vsel %vm630, %v714, 0
      %v1397 = vsel %vm630, %v715, 0
      %v1400 = vsel %vm630, %v716, 0
      %v1403 = vsel %vm630, %v717, 0
      %v1406 = vsel %vm630, %v718, 0
      %1408 = vmatprep.subr.mxu0 0.0
      %1409 = vmatpush1.msra.mxu0 0.0
      %1410 = vmatprep.subr.mxu0 0.0
      %1411 = vmatpush1.msra.mxu0 0.0
      %1412 = vmatprep.subr.mxu0 0.0
      %1413 = vmatpush1.msra.mxu0 0.0
      %1414 = vmatprep.subr.mxu0 0.0
      %1415 = vmatpush1.msra.mxu0 0.0
      %1416 = vmatprep.subr.mxu0 0.0
      %1417 = vmatpush1.msra.mxu0 0.0
      %1418 = vmatprep.subr.mxu0 0.0
      %1419 = vmatpush1.msra.mxu0 0.0
      %1420 = vmatprep.subr.mxu0 0.0
      %1421 = vmatpush1.msra.mxu0 0.0
      %1422 = vmatprep.subr.mxu0 0.0
      %1423 = vmatpush1.msra.mxu0 0.0
      %1424 = vmatprep.subr.mxu0 0.0
      %1425 = vmatpush1.msra.mxu0 %v821
      %1426 = vmatprep.subr.mxu0 0.0
      %1427 = vmatpush1.msra.mxu0 %v816
      %1428 = vmatprep.subr.mxu0 0.0
      %1429 = vmatpush1.msra.mxu0 %v811
      %1430 = vmatprep.subr.mxu0 0.0
      %1431 = vmatpush1.msra.mxu0 %v806
      %1432 = vmatprep.subr.mxu0 0.0
      %1433 = vmatpush1.msra.mxu0 %v801
      %1434 = vmatprep.subr.mxu0 0.0
      %1435 = vmatpush1.msra.mxu0 %v796
      %1436 = vmatprep.subr.mxu0 0.0
      %1437 = vmatpush1.msra.mxu0 %v791
      %1438 = vmatprep.subr.mxu0 0.0
      %1439 = vmatpush1.msra.mxu0 %v786
      %1440 = vmatprep.subr.mxu0 0.0
      %1441 = vmatpush2.msra.mxu0 0.0
      %1442 = vmatprep.subr.mxu0 0.0
      %1443 = vmatpush2.msra.mxu0 0.0
      %1444 = vmatprep.subr.mxu0 0.0
      %1445 = vmatpush2.msra.mxu0 0.0
      %1446 = vmatprep.subr.mxu0 0.0
      %1447 = vmatpush2.msra.mxu0 0.0
      %1448 = vmatprep.subr.mxu0 0.0
      %1449 = vmatpush2.msra.mxu0 0.0
      %1450 = vmatprep.subr.mxu0 0.0
      %1451 = vmatpush2.msra.mxu0 0.0
      %1452 = vmatprep.subr.mxu0 0.0
      %1453 = vmatpush2.msra.mxu0 0.0
      %1454 = vmatprep.subr.mxu0 0.0
      %1455 = vmatpush2.msra.mxu0 0.0
      %1456 = vmatprep.subr.mxu0 0.0
      %1457 = vmatpush2.msra.mxu0 0.0
      %1458 = vmatprep.subr.mxu0 0.0
      %1459 = vmatpush2.msra.mxu0 0.0
      %1460 = vmatprep.subr.mxu0 0.0
      %1461 = vmatpush2.msra.mxu0 0.0
      %1462 = vmatprep.subr.mxu0 0.0
      %1463 = vmatpush2.msra.mxu0 0.0
      %1464 = vmatprep.subr.mxu0 0.0
      %1465 = vmatpush2.msra.mxu0 0.0
      %1466 = vmatprep.subr.mxu0 0.0
      %1467 = vmatpush2.msra.mxu0 0.0
      %1468 = vmatprep.subr.mxu0 0.0
      %1469 = vmatpush2.msra.mxu0 0.0
      %1470 = vmatprep.subr.mxu0 0.0
      %1471 = vmatpush2.msra.mxu0 0.0
      %1472 = vmatprep.mubr.f32.mxu0 0.0
      %1473 = vmatmul.mubr.f32.gmra.mxu0 %v1385
      %v1474 = vpop.f32.mrf.mxu0
      %v1475 = vadd.f32 %v1346, %v1474
      %v1476 = vpop.f32.mrf.mxu0
      %1477 = vmatprep.mubr.f32.mxu0 0.0
      %1478 = vmatmul.mubr.f32.gmra.mxu0 %v1388
      %v1479 = vpop.f32.mrf.mxu0
      %v1480 = vadd.f32 %v1351, %v1479
      %v1481 = vpop.f32.mrf.mxu0
      %1482 = vmatprep.mubr.f32.mxu0 0.0
      %1483 = vmatmul.mubr.f32.gmra.mxu0 %v1391
      %v1484 = vpop.f32.mrf.mxu0
      %v1485 = vadd.f32 %v1356, %v1484
      %v1486 = vpop.f32.mrf.mxu0
      %1487 = vmatprep.mubr.f32.mxu0 0.0
      %1488 = vmatmul.mubr.f32.gmra.mxu0 %v1394
      %v1489 = vpop.f32.mrf.mxu0
      %v1490 = vadd.f32 %v1361, %v1489
      %v1491 = vpop.f32.mrf.mxu0
      %1492 = vmatprep.mubr.f32.mxu0 0.0
      %1493 = vmatmul.mubr.f32.gmra.mxu0 %v1397
      %v1494 = vpop.f32.mrf.mxu0
      %v1495 = vadd.f32 %v1366, %v1494
      %v1496 = vpop.f32.mrf.mxu0
      %1497 = vmatprep.mubr.f32.mxu0 0.0
      %1498 = vmatmul.mubr.f32.gmra.mxu0 %v1400
      %v1499 = vpop.f32.mrf.mxu0
      %v1500 = vadd.f32 %v1371, %v1499
      %v1501 = vpop.f32.mrf.mxu0
      %1502 = vmatprep.mubr.f32.mxu0 0.0
      %1503 = vmatmul.mubr.f32.gmra.mxu0 %v1403
      %v1504 = vpop.f32.mrf.mxu0
      %v1505 = vadd.f32 %v1376, %v1504
      %v1506 = vpop.f32.mrf.mxu0
      %1507 = vmatprep.mubr.f32.mxu0 0.0
      %1508 = vmatmul.mubr.f32.gmra.mxu0 %v1406
      %v1509 = vpop.f32.mrf.mxu0
      %v1510 = vadd.f32 %v1381, %v1509
      %v1511 = vpop.f32.mrf.mxu0
      %1512 = vdwg.mxu0
      %v1513 = vlaneseq
      %v1514 = vshrl.u32 %v1513, 7
      %v1515 = vsub.s32 2, %v1514
      %v1516 = vrot.slane %v284, %v1515
      %v1517 = vadd.f32 %v1475, %v1516
      %v1518 = vadd.f32 %v1480, %v1516
      %v1519 = vadd.f32 %v1485, %v1516
      %v1520 = vadd.f32 %v1490, %v1516
      %v1521 = vadd.f32 %v1495, %v1516
      %v1522 = vadd.f32 %v1500, %v1516
      %v1523 = vadd.f32 %v1505, %v1516
      %v1524 = vadd.f32 %v1510, %v1516
      %v1525 = vadd.f32 %v268, %v1517
      %v1526 = vadd.f32 %v269, %v1518
      %v1527 = vadd.f32 %v270, %v1519
      %v1528 = vadd.f32 %v271, %v1520
      %v1529 = vadd.f32 %v272, %v1521
      %v1530 = vadd.f32 %v273, %v1522
      %v1531 = vadd.f32 %v274, %v1523
      %v1532 = vadd.f32 %v275, %v1524
      %v1533 = vsel %vm294, %v1525, 0.0
      %1534 = vadd.xlane.f32.xlu0 %v1533
      %v1535 = vpop.xlane.xlu0 %1534
      %v1536 = vsel %vm294, %v1526, 0.0
      %1537 = vadd.xlane.f32.xlu0 %v1536
      %v1538 = vpop.xlane.xlu0 %1537
      %v1539 = vsel %vm294, %v1527, 0.0
      %1540 = vadd.xlane.f32.xlu0 %v1539
      %v1541 = vpop.xlane.xlu0 %1540
      %v1542 = vsel %vm294, %v1528, 0.0
      %1543 = vadd.xlane.f32.xlu0 %v1542
      %v1544 = vpop.xlane.xlu0 %1543
      %v1545 = vsel %vm294, %v1529, 0.0
      %1546 = vadd.xlane.f32.xlu0 %v1545
      %v1547 = vpop.xlane.xlu0 %1546
      %v1548 = vsel %vm294, %v1530, 0.0
      %1549 = vadd.xlane.f32.xlu0 %v1548
      %v1550 = vpop.xlane.xlu0 %1549
      %v1551 = vsel %vm294, %v1531, 0.0
      %1552 = vadd.xlane.f32.xlu0 %v1551
      %v1553 = vpop.xlane.xlu0 %1552
      %v1554 = vsel %vm294, %v1532, 0.0
      %1555 = vadd.xlane.f32.xlu0 %v1554
      %v1556 = vpop.xlane.xlu0 %1555
      %v1557 = vrcp.pop 8.0
      %v1558 = vmul.f32 %v1535, %v1557
      %v1559 = vmul.f32 %v1538, %v1557
      %v1560 = vmul.f32 %v1541, %v1557
      %v1561 = vmul.f32 %v1544, %v1557
      %v1562 = vmul.f32 %v1547, %v1557
      %v1563 = vmul.f32 %v1550, %v1557
      %v1564 = vmul.f32 %v1553, %v1557
      %v1565 = vmul.f32 %v1556, %v1557
      %v1566 = vsub.f32 %v1525, %v1558
      %v1567 = vsub.f32 %v1526, %v1559
      %v1568 = vsub.f32 %v1527, %v1560
      %v1569 = vsub.f32 %v1528, %v1561
      %v1570 = vsub.f32 %v1529, %v1562
      %v1571 = vsub.f32 %v1530, %v1563
      %v1572 = vsub.f32 %v1531, %v1564
      %v1573 = vsub.f32 %v1532, %v1565
      %v1574 = vmul.f32 %v1566, %v1566
      %v1575 = vmul.f32 %v1567, %v1567
      %v1576 = vmul.f32 %v1568, %v1568
      %v1577 = vmul.f32 %v1569, %v1569
      %v1578 = vmul.f32 %v1570, %v1570
      %v1579 = vmul.f32 %v1571, %v1571
      %v1580 = vmul.f32 %v1572, %v1572
      %v1581 = vmul.f32 %v1573, %v1573
      %v1582 = vsel %vm294, %v1574, 0.0
      %1583 = vadd.xlane.f32.xlu0 %v1582
      %v1584 = vpop.xlane.xlu0 %1583
      %v1585 = vsel %vm294, %v1575, 0.0
      %1586 = vadd.xlane.f32.xlu0 %v1585
      %v1587 = vpop.xlane.xlu0 %1586
      %v1588 = vsel %vm294, %v1576, 0.0
      %1589 = vadd.xlane.f32.xlu0 %v1588
      %v1590 = vpop.xlane.xlu0 %1589
      %v1591 = vsel %vm294, %v1577, 0.0
      %1592 = vadd.xlane.f32.xlu0 %v1591
      %v1593 = vpop.xlane.xlu0 %1592
      %v1594 = vsel %vm294, %v1578, 0.0
      %1595 = vadd.xlane.f32.xlu0 %v1594
      %v1596 = vpop.xlane.xlu0 %1595
      %v1597 = vsel %vm294, %v1579, 0.0
      %1598 = vadd.xlane.f32.xlu0 %v1597
      %v1599 = vpop.xlane.xlu0 %1598
      %v1600 = vsel %vm294, %v1580, 0.0
      %1601 = vadd.xlane.f32.xlu0 %v1600
      %v1602 = vpop.xlane.xlu0 %1601
      %v1603 = vsel %vm294, %v1581, 0.0
      %1604 = vadd.xlane.f32.xlu0 %v1603
      %v1605 = vpop.xlane.xlu0 %1604
      %v1606 = vmul.f32 %v1584, %v1557
      %v1607 = vmul.f32 %v1587, %v1557
      %v1608 = vmul.f32 %v1590, %v1557
      %v1609 = vmul.f32 %v1593, %v1557
      %v1610 = vmul.f32 %v1596, %v1557
      %v1611 = vmul.f32 %v1599, %v1557
      %v1612 = vmul.f32 %v1602, %v1557
      %v1613 = vmul.f32 %v1605, %v1557
      %v1614 = vadd.f32 %v1606, 1e-05
      %v1615 = vadd.f32 %v1607, 1e-05
      %v1616 = vadd.f32 %v1608, 1e-05
      %v1617 = vadd.f32 %v1609, 1e-05
      %v1618 = vadd.f32 %v1610, 1e-05
      %v1619 = vadd.f32 %v1611, 1e-05
      %v1620 = vadd.f32 %v1612, 1e-05
      %v1621 = vadd.f32 %v1613, 1e-05
      %v1622 = vrsqrt.pop %v1614
      %v1623 = vrsqrt.pop %v1615
      %v1624 = vrsqrt.pop %v1616
      %v1625 = vrsqrt.pop %v1617
      %v1626 = vrsqrt.pop %v1618
      %v1627 = vrsqrt.pop %v1619
      %v1628 = vrsqrt.pop %v1620
      %v1629 = vrsqrt.pop %v1621
      %v1630 = vmul.f32 %v1566, %v1622
      %v1631 = vmul.f32 %v1567, %v1623
      %v1632 = vmul.f32 %v1568, %v1624
      %v1633 = vmul.f32 %v1569, %v1625
      %v1634 = vmul.f32 %v1570, %v1626
      %v1635 = vmul.f32 %v1571, %v1627
      %v1636 = vmul.f32 %v1572, %v1628
      %v1637 = vmul.f32 %v1573, %v1629
      %v1638 = vlaneseq
      %v1639 = vshrl.u32 %v1638, 7
      %v1640 = vsub.s32 3, %v1639
      %v1641 = vrot.slane %v284, %v1640
      %v1642 = vmul.f32 %v1630, %v1641
      %v1643 = vmul.f32 %v1631, %v1641
      %v1644 = vmul.f32 %v1632, %v1641
      %v1645 = vmul.f32 %v1633, %v1641
      %v1646 = vmul.f32 %v1634, %v1641
      %v1647 = vmul.f32 %v1635, %v1641
      %v1648 = vmul.f32 %v1636, %v1641
      %v1649 = vmul.f32 %v1637, %v1641
      %v1650 = vlaneseq
      %v1651 = vshrl.u32 %v1650, 7
      %v1652 = vsub.s32 4, %v1651
      %v1653 = vrot.slane %v284, %v1652
      %v1654 = vadd.f32 %v1642, %v1653
      %v1655 = vadd.f32 %v1643, %v1653
      %v1656 = vadd.f32 %v1644, %v1653
      %v1657 = vadd.f32 %v1645, %v1653
      %v1658 = vadd.f32 %v1646, %v1653
      %v1659 = vadd.f32 %v1647, %v1653
      %v1660 = vadd.f32 %v1648, %v1653
      %v1661 = vadd.f32 %v1649, %v1653
      %v1662 = vlaneseq
      %v1663 = vshrl.u32 %v1662, 7
      %v1664 = vsub.s32 0, %v1663
      %v1665 = vrot.slane %v288, %v1664
      %v1667 = vsel %vm294, %v1654, 0
      %v1670 = vsel %vm294, %v1655, 0
      %v1673 = vsel %vm294, %v1656, 0
      %v1676 = vsel %vm294, %v1657, 0
      %v1679 = vsel %vm294, %v1658, 0
      %v1682 = vsel %vm294, %v1659, 0
      %v1685 = vsel %vm294, %v1660, 0
      %v1688 = vsel %vm294, %v1661, 0
      %1690 = vmatprep.subr.mxu0 0.0
      %1691 = vmatpush1.msra.mxu0 0.0
      %1692 = vmatprep.subr.mxu0 0.0
      %1693 = vmatpush1.msra.mxu0 0.0
      %1694 = vmatprep.subr.mxu0 0.0
      %1695 = vmatpush1.msra.mxu0 0.0
      %1696 = vmatprep.subr.mxu0 0.0
      %1697 = vmatpush1.msra.mxu0 0.0
      %1698 = vmatprep.subr.mxu0 0.0
      %1699 = vmatpush1.msra.mxu0 0.0
      %1700 = vmatprep.subr.mxu0 0.0
      %1701 = vmatpush1.msra.mxu0 0.0
      %1702 = vmatprep.subr.mxu0 0.0
      %1703 = vmatpush1.msra.mxu0 0.0
      %1704 = vmatprep.subr.mxu0 0.0
      %1705 = vmatpush1.msra.mxu0 0.0
      %1706 = vmatprep.subr.mxu0 0.0
      %1707 = vmatpush1.msra.mxu0 0.0
      %1708 = vmatprep.subr.mxu0 0.0
      %1709 = vmatpush1.msra.mxu0 0.0
      %1710 = vmatprep.subr.mxu0 0.0
      %1711 = vmatpush1.msra.mxu0 0.0
      %1712 = vmatprep.subr.mxu0 0.0
      %1713 = vmatpush1.msra.mxu0 0.0
      %1714 = vmatprep.subr.mxu0 0.0
      %1715 = vmatpush1.msra.mxu0 0.0
      %1716 = vmatprep.subr.mxu0 0.0
      %1717 = vmatpush1.msra.mxu0 0.0
      %1718 = vmatprep.subr.mxu0 0.0
      %1719 = vmatpush1.msra.mxu0 0.0
      %1720 = vmatprep.subr.mxu0 0.0
      %1721 = vmatpush1.msra.mxu0 %v287
      %1722 = vmatprep.subr.mxu0 0.0
      %1723 = vmatpush2.msra.mxu0 0.0
      %1724 = vmatprep.subr.mxu0 0.0
      %1725 = vmatpush2.msra.mxu0 0.0
      %1726 = vmatprep.subr.mxu0 0.0
      %1727 = vmatpush2.msra.mxu0 0.0
      %1728 = vmatprep.subr.mxu0 0.0
      %1729 = vmatpush2.msra.mxu0 0.0
      %1730 = vmatprep.subr.mxu0 0.0
      %1731 = vmatpush2.msra.mxu0 0.0
      %1732 = vmatprep.subr.mxu0 0.0
      %1733 = vmatpush2.msra.mxu0 0.0
      %1734 = vmatprep.subr.mxu0 0.0
      %1735 = vmatpush2.msra.mxu0 0.0
      %1736 = vmatprep.subr.mxu0 0.0
      %1737 = vmatpush2.msra.mxu0 0.0
      %1738 = vmatprep.subr.mxu0 0.0
      %1739 = vmatpush2.msra.mxu0 0.0
      %1740 = vmatprep.subr.mxu0 0.0
      %1741 = vmatpush2.msra.mxu0 0.0
      %1742 = vmatprep.subr.mxu0 0.0
      %1743 = vmatpush2.msra.mxu0 0.0
      %1744 = vmatprep.subr.mxu0 0.0
      %1745 = vmatpush2.msra.mxu0 0.0
      %1746 = vmatprep.subr.mxu0 0.0
      %1747 = vmatpush2.msra.mxu0 0.0
      %1748 = vmatprep.subr.mxu0 0.0
      %1749 = vmatpush2.msra.mxu0 0.0
      %1750 = vmatprep.subr.mxu0 0.0
      %1751 = vmatpush2.msra.mxu0 0.0
      %1752 = vmatprep.subr.mxu0 0.0
      %1753 = vmatpush2.msra.mxu0 0.0
      %1754 = vmatprep.mubr.f32.mxu0 0.0
      %1755 = vmatmul.mubr.f32.gmra.mxu0 %v1667
      %v1756 = vpop.f32.mrf.mxu0
      %v1757 = vadd.f32 %v1665, %v1756
      %v1758 = vpop.f32.mrf.mxu0
      %1759 = vmatprep.mubr.f32.mxu0 0.0
      %1760 = vmatmul.mubr.f32.gmra.mxu0 %v1670
      %v1761 = vpop.f32.mrf.mxu0
      %v1762 = vadd.f32 %v1665, %v1761
      %v1763 = vpop.f32.mrf.mxu0
      %1764 = vmatprep.mubr.f32.mxu0 0.0
      %1765 = vmatmul.mubr.f32.gmra.mxu0 %v1673
      %v1766 = vpop.f32.mrf.mxu0
      %v1767 = vadd.f32 %v1665, %v1766
      %v1768 = vpop.f32.mrf.mxu0
      %1769 = vmatprep.mubr.f32.mxu0 0.0
      %1770 = vmatmul.mubr.f32.gmra.mxu0 %v1676
      %v1771 = vpop.f32.mrf.mxu0
      %v1772 = vadd.f32 %v1665, %v1771
      %v1773 = vpop.f32.mrf.mxu0
      %1774 = vmatprep.mubr.f32.mxu0 0.0
      %1775 = vmatmul.mubr.f32.gmra.mxu0 %v1679
      %v1776 = vpop.f32.mrf.mxu0
      %v1777 = vadd.f32 %v1665, %v1776
      %v1778 = vpop.f32.mrf.mxu0
      %1779 = vmatprep.mubr.f32.mxu0 0.0
      %1780 = vmatmul.mubr.f32.gmra.mxu0 %v1682
      %v1781 = vpop.f32.mrf.mxu0
      %v1782 = vadd.f32 %v1665, %v1781
      %v1783 = vpop.f32.mrf.mxu0
      %1784 = vmatprep.mubr.f32.mxu0 0.0
      %1785 = vmatmul.mubr.f32.gmra.mxu0 %v1685
      %v1786 = vpop.f32.mrf.mxu0
      %v1787 = vadd.f32 %v1665, %v1786
      %v1788 = vpop.f32.mrf.mxu0
      %1789 = vmatprep.mubr.f32.mxu0 0.0
      %1790 = vmatmul.mubr.f32.gmra.mxu0 %v1688
      %v1791 = vpop.f32.mrf.mxu0
      %v1792 = vadd.f32 %v1665, %v1791
      %v1793 = vpop.f32.mrf.mxu0
      %1794 = vdwg.mxu0
      %v1795 = vmax.f32 %v1757, 0.0
      %v1796 = vmax.f32 %v1762, 0.0
      %v1797 = vmax.f32 %v1767, 0.0
      %v1798 = vmax.f32 %v1772, 0.0
      %v1799 = vmax.f32 %v1777, 0.0
      %v1800 = vmax.f32 %v1782, 0.0
      %v1801 = vmax.f32 %v1787, 0.0
      %v1802 = vmax.f32 %v1792, 0.0
      %v1803 = vlaneseq
      %v1804 = vshrl.u32 %v1803, 7
      %v1805 = vsub.s32 5, %v1804
      %v1806 = vrot.slane %v284, %v1805
      %vm1807 = vcmask 261120
      %v1809 = vsel %vm1807, %v1795, 0
      %v1812 = vsel %vm1807, %v1796, 0
      %v1815 = vsel %vm1807, %v1797, 0
      %v1818 = vsel %vm1807, %v1798, 0
      %v1821 = vsel %vm1807, %v1799, 0
      %v1824 = vsel %vm1807, %v1800, 0
      %v1827 = vsel %vm1807, %v1801, 0
      %v1830 = vsel %vm1807, %v1802, 0
      %1832 = vmatprep.subr.mxu0 0.0
      %1833 = vmatpush1.msra.mxu0 0.0
      %1834 = vmatprep.subr.mxu0 0.0
      %1835 = vmatpush1.msra.mxu0 0.0
      %1836 = vmatprep.subr.mxu0 0.0
      %1837 = vmatpush1.msra.mxu0 0.0
      %1838 = vmatprep.subr.mxu0 0.0
      %1839 = vmatpush1.msra.mxu0 0.0
      %1840 = vmatprep.subr.mxu0 0.0
      %1841 = vmatpush1.msra.mxu0 0.0
      %1842 = vmatprep.subr.mxu0 0.0
      %1843 = vmatpush1.msra.mxu0 0.0
      %1844 = vmatprep.subr.mxu0 0.0
      %1845 = vmatpush1.msra.mxu0 0.0
      %1846 = vmatprep.subr.mxu0 0.0
      %1847 = vmatpush1.msra.mxu0 0.0
      %1848 = vmatprep.subr.mxu0 0.0
      %1849 = vmatpush1.msra.mxu0 0.0
      %1850 = vmatprep.subr.mxu0 0.0
      %1851 = vmatpush1.msra.mxu0 0.0
      %1852 = vmatprep.subr.mxu0 0.0
      %1853 = vmatpush1.msra.mxu0 0.0
      %1854 = vmatprep.subr.mxu0 0.0
      %1855 = vmatpush1.msra.mxu0 0.0
      %1856 = vmatprep.subr.mxu0 0.0
      %1857 = vmatpush1.msra.mxu0 %v293
      %1858 = vmatprep.subr.mxu0 0.0
      %1859 = vmatpush1.msra.mxu0 %v292
      %1860 = vmatprep.subr.mxu0 0.0
      %1861 = vmatpush1.msra.mxu0 %v291
      %1862 = vmatprep.subr.mxu0 0.0
      %1863 = vmatpush1.msra.mxu0 %v290
      %1864 = vmatprep.subr.mxu0 0.0
      %1865 = vmatpush2.msra.mxu0 0.0
      %1866 = vmatprep.subr.mxu0 0.0
      %1867 = vmatpush2.msra.mxu0 0.0
      %1868 = vmatprep.subr.mxu0 0.0
      %1869 = vmatpush2.msra.mxu0 0.0
      %1870 = vmatprep.subr.mxu0 0.0
      %1871 = vmatpush2.msra.mxu0 0.0
      %1872 = vmatprep.subr.mxu0 0.0
      %1873 = vmatpush2.msra.mxu0 0.0
      %1874 = vmatprep.subr.mxu0 0.0
      %1875 = vmatpush2.msra.mxu0 0.0
      %1876 = vmatprep.subr.mxu0 0.0
      %1877 = vmatpush2.msra.mxu0 0.0
      %1878 = vmatprep.subr.mxu0 0.0
      %1879 = vmatpush2.msra.mxu0 0.0
      %1880 = vmatprep.subr.mxu0 0.0
      %1881 = vmatpush2.msra.mxu0 0.0
      %1882 = vmatprep.subr.mxu0 0.0
      %1883 = vmatpush2.msra.mxu0 0.0
      %1884 = vmatprep.subr.mxu0 0.0
      %1885 = vmatpush2.msra.mxu0 0.0
      %1886 = vmatprep.subr.mxu0 0.0
      %1887 = vmatpush2.msra.mxu0 0.0
      %1888 = vmatprep.subr.mxu0 0.0
      %1889 = vmatpush2.msra.mxu0 0.0
      %1890 = vmatprep.subr.mxu0 0.0
      %1891 = vmatpush2.msra.mxu0 0.0
      %1892 = vmatprep.subr.mxu0 0.0
      %1893 = vmatpush2.msra.mxu0 0.0
      %1894 = vmatprep.subr.mxu0 0.0
      %1895 = vmatpush2.msra.mxu0 0.0
      %1896 = vmatprep.mubr.f32.mxu0 0.0
      %1897 = vmatmul.mubr.f32.gmra.mxu0 %v1809
      %v1898 = vpop.f32.mrf.mxu0
      %v1899 = vadd.f32 %v1806, %v1898
      %v1900 = vpop.f32.mrf.mxu0
      %1901 = vmatprep.mubr.f32.mxu0 0.0
      %1902 = vmatmul.mubr.f32.gmra.mxu0 %v1812
      %v1903 = vpop.f32.mrf.mxu0
      %v1904 = vadd.f32 %v1806, %v1903
      %v1905 = vpop.f32.mrf.mxu0
      %1906 = vmatprep.mubr.f32.mxu0 0.0
      %1907 = vmatmul.mubr.f32.gmra.mxu0 %v1815
      %v1908 = vpop.f32.mrf.mxu0
      %v1909 = vadd.f32 %v1806, %v1908
      %v1910 = vpop.f32.mrf.mxu0
      %1911 = vmatprep.mubr.f32.mxu0 0.0
      %1912 = vmatmul.mubr.f32.gmra.mxu0 %v1818
      %v1913 = vpop.f32.mrf.mxu0
      %v1914 = vadd.f32 %v1806, %v1913
      %v1915 = vpop.f32.mrf.mxu0
      %1916 = vmatprep.mubr.f32.mxu0 0.0
      %1917 = vmatmul.mubr.f32.gmra.mxu0 %v1821
      %v1918 = vpop.f32.mrf.mxu0
      %v1919 = vadd.f32 %v1806, %v1918
      %v1920 = vpop.f32.mrf.mxu0
      %1921 = vmatprep.mubr.f32.mxu0 0.0
      %1922 = vmatmul.mubr.f32.gmra.mxu0 %v1824
      %v1923 = vpop.f32.mrf.mxu0
      %v1924 = vadd.f32 %v1806, %v1923
      %v1925 = vpop.f32.mrf.mxu0
      %1926 = vmatprep.mubr.f32.mxu0 0.0
      %1927 = vmatmul.mubr.f32.gmra.mxu0 %v1827
      %v1928 = vpop.f32.mrf.mxu0
      %v1929 = vadd.f32 %v1806, %v1928
      %v1930 = vpop.f32.mrf.mxu0
      %1931 = vmatprep.mubr.f32.mxu0 0.0
      %1932 = vmatmul.mubr.f32.gmra.mxu0 %v1830
      %v1933 = vpop.f32.mrf.mxu0
      %v1934 = vadd.f32 %v1806, %v1933
      %v1935 = vpop.f32.mrf.mxu0
      %1936 = vdwg.mxu0
      %v1937 = vadd.f32 %v1654, %v1899
      %v1938 = vadd.f32 %v1655, %v1904
      %v1939 = vadd.f32 %v1656, %v1909
      %v1940 = vadd.f32 %v1657, %v1914
      %v1941 = vadd.f32 %v1658, %v1919
      %v1942 = vadd.f32 %v1659, %v1924
      %v1943 = vadd.f32 %v1660, %v1929
      %v1944 = vadd.f32 %v1661, %v1934
      %v1945 = vsel %vm294, %v1937, 0.0
      %1946 = vadd.xlane.f32.xlu0 %v1945
      %v1947 = vpop.xlane.xlu0 %1946
      %v1948 = vsel %vm294, %v1938, 0.0
      %1949 = vadd.xlane.f32.xlu0 %v1948
      %v1950 = vpop.xlane.xlu0 %1949
      %v1951 = vsel %vm294, %v1939, 0.0
      %1952 = vadd.xlane.f32.xlu0 %v1951
      %v1953 = vpop.xlane.xlu0 %1952
      %v1954 = vsel %vm294, %v1940, 0.0
      %1955 = vadd.xlane.f32.xlu0 %v1954
      %v1956 = vpop.xlane.xlu0 %1955
      %v1957 = vsel %vm294, %v1941, 0.0
      %1958 = vadd.xlane.f32.xlu0 %v1957
      %v1959 = vpop.xlane.xlu0 %1958
      %v1960 = vsel %vm294, %v1942, 0.0
      %1961 = vadd.xlane.f32.xlu0 %v1960
      %v1962 = vpop.xlane.xlu0 %1961
      %v1963 = vsel %vm294, %v1943, 0.0
      %1964 = vadd.xlane.f32.xlu0 %v1963
      %v1965 = vpop.xlane.xlu0 %1964
      %v1966 = vsel %vm294, %v1944, 0.0
      %1967 = vadd.xlane.f32.xlu0 %v1966
      %v1968 = vpop.xlane.xlu0 %1967
      %v1969 = vmul.f32 %v1947, %v1557
      %v1970 = vmul.f32 %v1950, %v1557
      %v1971 = vmul.f32 %v1953, %v1557
      %v1972 = vmul.f32 %v1956, %v1557
      %v1973 = vmul.f32 %v1959, %v1557
      %v1974 = vmul.f32 %v1962, %v1557
      %v1975 = vmul.f32 %v1965, %v1557
      %v1976 = vmul.f32 %v1968, %v1557
      %v1977 = vsub.f32 %v1937, %v1969
      %v1978 = vsub.f32 %v1938, %v1970
      %v1979 = vsub.f32 %v1939, %v1971
      %v1980 = vsub.f32 %v1940, %v1972
      %v1981 = vsub.f32 %v1941, %v1973
      %v1982 = vsub.f32 %v1942, %v1974
      %v1983 = vsub.f32 %v1943, %v1975
      %v1984 = vsub.f32 %v1944, %v1976
      %v1985 = vmul.f32 %v1977, %v1977
      %v1986 = vmul.f32 %v1978, %v1978
      %v1987 = vmul.f32 %v1979, %v1979
      %v1988 = vmul.f32 %v1980, %v1980
      %v1989 = vmul.f32 %v1981, %v1981
      %v1990 = vmul.f32 %v1982, %v1982
      %v1991 = vmul.f32 %v1983, %v1983
      %v1992 = vmul.f32 %v1984, %v1984
      %v1993 = vsel %vm294, %v1985, 0.0
      %1994 = vadd.xlane.f32.xlu0 %v1993
      %v1995 = vpop.xlane.xlu0 %1994
      %v1996 = vsel %vm294, %v1986, 0.0
      %1997 = vadd.xlane.f32.xlu0 %v1996
      %v1998 = vpop.xlane.xlu0 %1997
      %v1999 = vsel %vm294, %v1987, 0.0
      %2000 = vadd.xlane.f32.xlu0 %v1999
      %v2001 = vpop.xlane.xlu0 %2000
      %v2002 = vsel %vm294, %v1988, 0.0
      %2003 = vadd.xlane.f32.xlu0 %v2002
      %v2004 = vpop.xlane.xlu0 %2003
      %v2005 = vsel %vm294, %v1989, 0.0
      %2006 = vadd.xlane.f32.xlu0 %v2005
      %v2007 = vpop.xlane.xlu0 %2006
      %v2008 = vsel %vm294, %v1990, 0.0
      %2009 = vadd.xlane.f32.xlu0 %v2008
      %v2010 = vpop.xlane.xlu0 %2009
      %v2011 = vsel %vm294, %v1991, 0.0
      %2012 = vadd.xlane.f32.xlu0 %v2011
      %v2013 = vpop.xlane.xlu0 %2012
      %v2014 = vsel %vm294, %v1992, 0.0
      %2015 = vadd.xlane.f32.xlu0 %v2014
      %v2016 = vpop.xlane.xlu0 %2015
      %v2017 = vmul.f32 %v1995, %v1557
      %v2018 = vmul.f32 %v1998, %v1557
      %v2019 = vmul.f32 %v2001, %v1557
      %v2020 = vmul.f32 %v2004, %v1557
      %v2021 = vmul.f32 %v2007, %v1557
      %v2022 = vmul.f32 %v2010, %v1557
      %v2023 = vmul.f32 %v2013, %v1557
      %v2024 = vmul.f32 %v2016, %v1557
      %v2025 = vadd.f32 %v2017, 1e-05
      %v2026 = vadd.f32 %v2018, 1e-05
      %v2027 = vadd.f32 %v2019, 1e-05
      %v2028 = vadd.f32 %v2020, 1e-05
      %v2029 = vadd.f32 %v2021, 1e-05
      %v2030 = vadd.f32 %v2022, 1e-05
      %v2031 = vadd.f32 %v2023, 1e-05
      %v2032 = vadd.f32 %v2024, 1e-05
      %v2033 = vrsqrt.pop %v2025
      %v2034 = vrsqrt.pop %v2026
      %v2035 = vrsqrt.pop %v2027
      %v2036 = vrsqrt.pop %v2028
      %v2037 = vrsqrt.pop %v2029
      %v2038 = vrsqrt.pop %v2030
      %v2039 = vrsqrt.pop %v2031
      %v2040 = vrsqrt.pop %v2032
      %v2041 = vmul.f32 %v1977, %v2033
      %v2042 = vmul.f32 %v1978, %v2034
      %v2043 = vmul.f32 %v1979, %v2035
      %v2044 = vmul.f32 %v1980, %v2036
      %v2045 = vmul.f32 %v1981, %v2037
      %v2046 = vmul.f32 %v1982, %v2038
      %v2047 = vmul.f32 %v1983, %v2039
      %v2048 = vmul.f32 %v1984, %v2040
      %v2049 = vlaneseq
      %v2050 = vshrl.u32 %v2049, 7
      %v2051 = vsub.s32 6, %v2050
      %v2052 = vrot.slane %v284, %v2051
      %v2053 = vmul.f32 %v2041, %v2052
      %v2054 = vmul.f32 %v2042, %v2052
      %v2055 = vmul.f32 %v2043, %v2052
      %v2056 = vmul.f32 %v2044, %v2052
      %v2057 = vmul.f32 %v2045, %v2052
      %v2058 = vmul.f32 %v2046, %v2052
      %v2059 = vmul.f32 %v2047, %v2052
      %v2060 = vmul.f32 %v2048, %v2052
      %v2061 = vlaneseq
      %v2062 = vshrl.u32 %v2061, 7
      %v2063 = vsub.s32 7, %v2062
      %v2064 = vrot.slane %v284, %v2063
      %v2065 = vadd.f32 %v2053, %v2064
      %v2066 = vadd.f32 %v2054, %v2064
      %v2067 = vadd.f32 %v2055, %v2064
      %v2068 = vadd.f32 %v2056, %v2064
      %v2069 = vadd.f32 %v2057, %v2064
      %v2070 = vadd.f32 %v2058, %v2064
      %v2071 = vadd.f32 %v2059, %v2064
      %v2072 = vadd.f32 %v2060, %v2064
      %2073 = vst.msk [vmem:[#allocation2] sm:$0xff] %vm294, %v2065
      %2074 = vst.msk [vmem:[#allocation2 + $0x8] sm:$0xff] %vm294, %v2066
      %2075 = vst.msk [vmem:[#allocation2 + $0x10] sm:$0xff] %vm294, %v2067
      %2076 = vst.msk [vmem:[#allocation2 + $0x18] sm:$0xff] %vm294, %v2068
      %2077 = vst.msk [vmem:[#allocation2 + $0x20] sm:$0xff] %vm294, %v2069
      %2078 = vst.msk [vmem:[#allocation2 + $0x28] sm:$0xff] %vm294, %v2070
      %2079 = vst.msk [vmem:[#allocation2 + $0x30] sm:$0xff] %vm294, %v2071
      %2080 = vst.msk [vmem:[#allocation2 + $0x38] sm:$0xff] %vm294, %v2072
      %2081 = vst.msk [vmem:[%s246] sm:$0xff] %vm294, %v2065
      %2082 = vst.msk [vmem:[%s246 + $0x8] sm:$0xff] %vm294, %v2066
      %2083 = vst.msk [vmem:[%s246 + $0x10] sm:$0xff] %vm294, %v2067
      %2084 = vst.msk [vmem:[%s246 + $0x18] sm:$0xff] %vm294, %v2068
      %2085 = vst.msk [vmem:[%s246 + $0x20] sm:$0xff] %vm294, %v2069
      %2086 = vst.msk [vmem:[%s246 + $0x28] sm:$0xff] %vm294, %v2070
      %2087 = vst.msk [vmem:[%s246 + $0x30] sm:$0xff] %vm294, %v2071
      %2088 = vst.msk [vmem:[%s246 + $0x38] sm:$0xff] %vm294, %v2072
      %p2089 = scmp.lt.s32.totalorder %s21, 2
      %s2090 = scalar_select %p2089, %s21, 2
      %p2091 = scmp.lt.s32.totalorder %s20, 1
      %s2092 = scalar_select %p2091, %s20, 1
      %s2093 = smul.addr %s2092, 8
      %s2094 = smul.addr %s2090, 16
      %s2095 = sadd.s32 %s2093, %s2094
      %s2096 = smul.addr %s2095, 8
      %s2097 = scalar_lea.vmem %s5, %s2096
      // Predicated region
      $region45: #{build_teacher_net_forward.1} parent=39 // pred_check
        %p2098 = pneg %p158
      $region46: #{build_teacher_net_forward.1} parent=39 // pred_check_branch
        %2100 = sbr.rel (%p2098) target = $region48
      $region47: #{build_teacher_net_forward.1} parent=39 // pred_region
        _
      $region48: #{build_teacher_net_forward.1} parent=39 // pred_fallthru
        _
    $region40: #{build_teacher_net_forward.1} parent=5 // pred_fallthru
      _
    %p2101 = scmp.le.s32.totalorder 2, %s11
    // Predicated region
    $region49: #{build_teacher_net_forward.1} parent=5 // pred_check
      %p2102 = pneg %p2101
    $region50: #{build_teacher_net_forward.1} parent=5 // pred_check_branch
      %2104 = sbr.rel (%p2102) target = $region52
    $region51: #{build_teacher_net_forward.1} parent=5 // pred_region
      %s2105 = ssub.s32 %s11, 2
      // Predicated region
      $region53: #{build_teacher_net_forward.1} parent=51 // pred_check
        %p2106 = pneg %p164
      $region54: #{build_teacher_net_forward.1} parent=51 // pred_check_branch
        %2108 = sbr.rel (%p2106) target = $region56
      $region55: #{build_teacher_net_forward.1} parent=51 // pred_region
        %p2109 = scmp.lt.s32.totalorder %s23, 2
        %s2110 = scalar_select %p2109, %s23, 2
        %p2111 = scmp.lt.s32.totalorder %s22, 1
        %s2112 = scalar_select %p2111, %s22, 1
        %s2113 = smul.addr %s2112, 8
        %s2114 = smul.addr %s2110, 16
        %s2115 = sadd.s32 %s2113, %s2114
        %s2116 = smul.addr %s2115, 8
        %s2117 = scalar_lea.vmem %s5, %s2116
      $region56: #{build_teacher_net_forward.1} parent=51 // pred_fallthru
        _
    $region52: #{build_teacher_net_forward.1} parent=5 // pred_fallthru
      _
  $region6: #{build_teacher_net_forward.1} parent=0 // loop_footer
    %s15 = sadd.s32 1, %s11
  $region7: #{build_teacher_net_forward.1} parent=0 // loop_footer_branch
    %10 = sbr.rel target = $region3
  $region8: #{build_teacher_net_forward.1} parent=0 // loop_exit
    _

</llo_original>
